<compile_context>
chip_gen: v7x
topology: tpu7x:2x2x1
jax: 0.10.0
libtpu: 0.0.40
codegen_flags: <defaults>
</compile_context>

<pallas_src>
import functools

import jax
import jax.numpy as jnp
from jax.experimental import pallas as pl
from jax.experimental.pallas import tpu as pltpu

EPS = 1e-5
_VMEM = pl.BlockSpec(memory_space=pltpu.MemorySpace.VMEM)


# ------------------------------ fused kernel ------------------------------- #

def _wdcnn_fused_kernel(x_ref, w1_ref, w2_ref, w3_ref, w4_ref, w5_ref,
                        gb_ref, fcw_ref, fcb_ref, o_ref, scr, *, n):
    """Whole WDCNN forward for batch size `n`; everything stays in VMEM.

    x_ref : (n*11, 192)  input chunk rows: rows=(sample, 16-chunk), cols=(cin, w)
    w1_ref: (4, 192, 16) conv1 chunk-tap weights
    w2_ref: (3, 16, 32)  conv2 tap weights          w3_ref: (3, 32, 64)
    w4_ref: (64, 64)     conv4 centre-tap weight     w5_ref: (64, 64)
    gb_ref: (10, 64)     rows g1,b1,g2,b2,...,g5,b5 (zero-padded to 64 lanes)
    fcw_ref: (64, 128)   fc1 weight (transposed), fcb_ref: (1, 128)
    o_ref : (n, 128)     lane-dense output
    scr   : (n*8+2, 64)  single activation workspace (guarded layout for convs)
    """
    f32 = jnp.float32
    L1, LC, K1 = 8, 11, 4     # conv1 out length / 16-chunks per sample / taps

    def bn_relu(y, bn_idx, cout):
        # training-mode BatchNorm1d (stats over all rows = N*L) + affine + ReLU
        g = gb_ref[pl.ds(2 * bn_idx, 1), pl.ds(0, cout)]           # (1, cout)
        b = gb_ref[pl.ds(2 * bn_idx + 1, 1), pl.ds(0, cout)]       # (1, cout)
        mu = jnp.mean(y, axis=0, keepdims=True)
        var = jnp.mean(jnp.square(y - mu), axis=0, keepdims=True)  # biased var
        yn = (y - mu) * jax.lax.rsqrt(var + EPS)                   # EUP rsqrt
        return jnp.maximum(yn * g + b, 0.0)

    def pool_pairs(n_pairs, cout):
        # MaxPool1d(k=2, s=2) along L == max of adjacent rows.  Pre-pool rows
        # live at scr[0:2*n_pairs, :cout]; two strided sublane loads + max.
        top = scr[pl.ds(0, n_pairs, stride=2), pl.ds(0, cout)]
        bot = scr[pl.ds(1, n_pairs, stride=2), pl.ds(0, cout)]
        return jnp.maximum(top, bot)                               # (n_pairs, cout)

    def store_guarded(pooled, n_rows, cout):
        # store pooled rows at 1..n_rows with a zero guard row on each side so
        # the next k=3 conv can read its +-1 shifted windows fully in-bounds.
        z = jnp.zeros((1, cout), f32)
        scr[pl.ds(1, n_rows), pl.ds(0, cout)] = pooled
        scr[pl.ds(0, 1), pl.ds(0, cout)] = z
        scr[pl.ds(n_rows + 1, 1), pl.ds(0, cout)] = z

    def conv3(w_ref, rows, seq_len, cin):
        # Conv1d(k=3, stride=1, padding=1, no bias) on scr guarded rows
        # 1..rows, expressed as 3 per-tap matmuls on shifted row windows.
        prv = scr[pl.ds(0, rows), pl.ds(0, cin)]
        cur = scr[pl.ds(1, rows), pl.ds(0, cin)]
        nxt = scr[pl.ds(2, rows), pl.ds(0, cin)]
        # position-within-sample; seq_len is a power of two here (4 or 2)
        pos = jax.lax.broadcasted_iota(jnp.int32, (rows, 1), 0) & (seq_len - 1)
        prv = jnp.where(pos == 0, 0.0, prv)              # zero pad at l == 0
        nxt = jnp.where(pos == seq_len - 1, 0.0, nxt)    # zero pad at l == L-1
        return (jnp.dot(prv, w_ref[0], preferred_element_type=f32)
                + jnp.dot(cur, w_ref[1], preferred_element_type=f32)
                + jnp.dot(nxt, w_ref[2], preferred_element_type=f32))

    # ---- block 1: Conv1d(12,16,k=64,s=16) as 4 chunk-tap matmuls ----
    for b in range(n):
        acc = None
        for kc in range(K1):
            rows = x_ref[pl.ds(b * LC + kc, L1), :]                # (8, 192)
            part = jnp.dot(rows, w1_ref[kc], preferred_element_type=f32)
            acc = part if acc is None else acc + part
        scr[pl.ds(b * L1, L1), pl.ds(0, 16)] = acc                 # (n*8, 16)
    h = bn_relu(scr[pl.ds(0, n * L1), pl.ds(0, 16)], 0, 16)
    scr[pl.ds(0, n * L1), pl.ds(0, 16)] = h
    store_guarded(pool_pairs(n * 4, 16), n * 4, 16)                # L: 8 -> 4

    # ---- block 2: Conv1d(16,32,k=3,p=1) ----
    h = bn_relu(conv3(w2_ref, rows=n * 4, seq_len=4, cin=16), 1, 32)
    scr[pl.ds(0, n * 4), pl.ds(0, 32)] = h
    store_guarded(pool_pairs(n * 2, 32), n * 2, 32)                # L: 4 -> 2

    # ---- block 3: Conv1d(32,64,k=3,p=1) ----
    h = bn_relu(conv3(w3_ref, rows=n * 2, seq_len=2, cin=32), 2, 64)
    scr[pl.ds(0, n * 2), pl.ds(0, 64)] = h
    h = pool_pairs(n, 64)                                          # (n, 64), L: 2 -> 1

    # ---- blocks 4 & 5: at L=1 only the centre tap of the k=3 conv can
    #      contribute (neighbours are zero padding) and MaxPool1d(k=2, s=2,
    #      padding=1) on L=1 is the identity.
    h = bn_relu(jnp.dot(h, w4_ref[...], preferred_element_type=f32), 3, 64)
    h = bn_relu(jnp.dot(h, w5_ref[...], preferred_element_type=f32), 4, 64)

    # ---- Flatten (identity at L=1) + fc1: Linear(64, 128) ----
    o_ref[...] = jnp.dot(h, fcw_ref[...], preferred_element_type=f32) + fcb_ref[...]


# ------------------------------- JAX wrapper -------------------------------- #

def wdcnn_forward(x, p):
    """x: (N, 12, 176) float32 -> (N, 128) float32, one fused pallas_call."""
    N, cin, L = x.shape
    assert cin == 12 and L == 176, "WDCNN + fc1(64,128) requires (N, 12, 176)"

    # input prep: (N, 12, 176) -> (N*11, 192) chunk rows (stride 16 | kernel 64)
    xc = x.reshape(N, cin, L // 16, 16)                      # (N, 12, 11, 16)
    x_rows = jnp.transpose(xc, (0, 2, 1, 3)).reshape(N * (L // 16), cin * 16)

    # weight layout prep (tiny, once per call)
    w1 = p["w1"].reshape(16, cin, 4, 16)                     # (cout, cin, tap, 16)
    w1t = jnp.stack(
        [jnp.transpose(w1[:, :, kc, :].reshape(16, cin * 16)) for kc in range(4)],
        axis=0)                                              # (4, 192, 16)

    def taps3(w):                                            # (cout,cin,3)->(3,cin,cout)
        return jnp.transpose(w, (2, 1, 0))

    w2t, w3t = taps3(p["w2"]), taps3(p["w3"])
    w4c = jnp.transpose(p["w4"][:, :, 1])                    # centre tap, (64, 64)
    w5c = jnp.transpose(p["w5"][:, :, 1])                    # centre tap, (64, 64)

    def pad64(v):
        return jnp.pad(v, (0, 64 - v.shape[0]))

    # pack all BN gamma/beta into one small VMEM constant block
    gb = jnp.stack([pad64(v) for pair in ((p["g1"], p["be1"]), (p["g2"], p["be2"]),
                                          (p["g3"], p["be3"]), (p["g4"], p["be4"]),
                                          (p["g5"], p["be5"]))
                    for v in pair], axis=0)                  # (10, 64)

    fcw = jnp.transpose(p["fc1_w"])                          # (64, 128)
    fcb = p["fc1_b"].reshape(1, 128)

    # NOTE: conv biases b1..b5 are intentionally not passed -- training-mode
    # BatchNorm mean subtraction cancels them exactly.
    return pl.pallas_call(
        functools.partial(_wdcnn_fused_kernel, n=N),
        out_shape=jax.ShapeDtypeStruct((N, 128), jnp.float32),
        in_specs=[_VMEM] * 9,
        out_specs=_VMEM,
        scratch_shapes=[pltpu.VMEM((N * 8 + 2, 64), jnp.float32)],
    )(x_rows, w1t, w2t, w3t, w4c, w5c, gb, fcw, fcb)


# --------------------------------- params ----------------------------------- #

def init_params(key):
    ks = jax.random.split(key, 12)

    def conv_w(k, cout, cin_, ksz):
        return 0.05 * jax.random.normal(k, (cout, cin_, ksz), jnp.float32)

    # Dense_layer1 / pred_loss exist in the PyTorch __init__ but are unused in
    # forward(), so they are omitted.  Conv biases b1..b5 are kept for module
    # fidelity but are unused (cancelled by training-mode BatchNorm).
    return {
        "w1": conv_w(ks[0], 16, 12, 64),
        "b1": 0.05 * jax.random.normal(ks[1], (16,), jnp.float32),
        "g1": jnp.ones((16,), jnp.float32), "be1": jnp.zeros((16,), jnp.float32),
        "w2": conv_w(ks[2], 32, 16, 3),
        "b2": 0.05 * jax.random.normal(ks[3], (32,), jnp.float32),
        "g2": jnp.ones((32,), jnp.float32), "be2": jnp.zeros((32,), jnp.float32),
        "w3": conv_w(ks[4], 64, 32, 3),
        "b3": 0.05 * jax.random.normal(ks[5], (64,), jnp.float32),
        "g3": jnp.ones((64,), jnp.float32), "be3": jnp.zeros((64,), jnp.float32),
        "w4": conv_w(ks[6], 64, 64, 3),
        "b4": 0.05 * jax.random.normal(ks[7], (64,), jnp.float32),
        "g4": jnp.ones((64,), jnp.float32), "be4": jnp.zeros((64,), jnp.float32),
        "w5": conv_w(ks[8], 64, 64, 3),
        "b5": 0.05 * jax.random.normal(ks[9], (64,), jnp.float32),
        "g5": jnp.ones((64,), jnp.float32), "be5": jnp.zeros((64,), jnp.float32),
        "fc1_w": 0.05 * jax.random.normal(ks[10], (128, 64), jnp.float32),
        "fc1_b": 0.05 * jax.random.normal(ks[11], (128,), jnp.float32),
    }


if __name__ == "__main__":
    key = jax.random.PRNGKey(0)
    k_x, k_p = jax.random.split(key)

    N, CIN, L = 2, 12, 176  # smallest L giving the 64 flattened features fc1 needs
    x = jax.random.normal(k_x, (N, CIN, L), jnp.float32)
    params = init_params(k_p)

    out = jax.jit(wdcnn_forward)(x, params)
    out = jax.block_until_ready(out)

    assert out.shape == (N, 128), out.shape
    assert bool(jnp.all(jnp.isfinite(out)))
    print("KERNEL_OK")
</pallas_src>

<mosaic_0001>
module attributes {stable_mosaic.version = 11 : i64} {
  func.func @_wdcnn_fused_kernel(%arg0: memref<22x192xf32, #tpu.memory_space<vmem>>, %arg1: memref<4x192x16xf32, #tpu.memory_space<vmem>>, %arg2: memref<3x16x32xf32, #tpu.memory_space<vmem>>, %arg3: memref<3x32x64xf32, #tpu.memory_space<vmem>>, %arg4: memref<64x64xf32, #tpu.memory_space<vmem>>, %arg5: memref<64x64xf32, #tpu.memory_space<vmem>>, %arg6: memref<10x64xf32, #tpu.memory_space<vmem>>, %arg7: memref<64x128xf32, #tpu.memory_space<vmem>>, %arg8: memref<1x128xf32, #tpu.memory_space<vmem>>, %arg9: memref<2x128xf32, #tpu.memory_space<vmem>>, %arg10: memref<18x64xf32, #tpu.memory_space<vmem>>) attributes {dimension_semantics = [], scalar_prefetch = 0 : i64, scratch_operands = 1 : i64, tpu.core_type = #tpu.core_type<tc>} {
    %c0 = arith.constant 0 : index
    %c0_0 = arith.constant 0 : index
    %0 = vector.load %arg0[%c0, %c0_0] : memref<22x192xf32, #tpu.memory_space<vmem>>, vector<8x192xf32>
    %c0_1 = arith.constant 0 : index
    %c0_2 = arith.constant 0 : index
    %c0_3 = arith.constant 0 : index
    %1 = vector.load %arg1[%c0_1, %c0_2, %c0_3] : memref<4x192x16xf32, #tpu.memory_space<vmem>>, vector<1x192x16xf32>
    %2 = vector.shape_cast %1 : vector<1x192x16xf32> to vector<192x16xf32>
    %cst = arith.constant dense<0.000000e+00> : vector<8x16xf32>
    %3 = tpu.matmul %0, %2, %cst {dimension_numbers = #tpu.dot_dimension_numbers<[1], [0], [0], [1], [0, 0, 1, 1], [], []>} : vector<8x192xf32>, vector<192x16xf32>, vector<8x16xf32> -> vector<8x16xf32>
    %c1 = arith.constant 1 : index
    %c0_4 = arith.constant 0 : index
    %4 = vector.load %arg0[%c1, %c0_4] : memref<22x192xf32, #tpu.memory_space<vmem>>, vector<8x192xf32>
    %c1_5 = arith.constant 1 : index
    %c0_6 = arith.constant 0 : index
    %c0_7 = arith.constant 0 : index
    %5 = vector.load %arg1[%c1_5, %c0_6, %c0_7] : memref<4x192x16xf32, #tpu.memory_space<vmem>>, vector<1x192x16xf32>
    %6 = vector.shape_cast %5 : vector<1x192x16xf32> to vector<192x16xf32>
    %cst_8 = arith.constant dense<0.000000e+00> : vector<8x16xf32>
    %7 = tpu.matmul %4, %6, %cst_8 {dimension_numbers = #tpu.dot_dimension_numbers<[1], [0], [0], [1], [0, 0, 1, 1], [], []>} : vector<8x192xf32>, vector<192x16xf32>, vector<8x16xf32> -> vector<8x16xf32>
    %8 = arith.addf %3, %7 : vector<8x16xf32>
    %c2 = arith.constant 2 : index
    %c0_9 = arith.constant 0 : index
    %9 = vector.load %arg0[%c2, %c0_9] : memref<22x192xf32, #tpu.memory_space<vmem>>, vector<8x192xf32>
    %c2_10 = arith.constant 2 : index
    %c0_11 = arith.constant 0 : index
    %c0_12 = arith.constant 0 : index
    %10 = vector.load %arg1[%c2_10, %c0_11, %c0_12] : memref<4x192x16xf32, #tpu.memory_space<vmem>>, vector<1x192x16xf32>
    %11 = vector.shape_cast %10 : vector<1x192x16xf32> to vector<192x16xf32>
    %cst_13 = arith.constant dense<0.000000e+00> : vector<8x16xf32>
    %12 = tpu.matmul %9, %11, %cst_13 {dimension_numbers = #tpu.dot_dimension_numbers<[1], [0], [0], [1], [0, 0, 1, 1], [], []>} : vector<8x192xf32>, vector<192x16xf32>, vector<8x16xf32> -> vector<8x16xf32>
    %13 = arith.addf %8, %12 : vector<8x16xf32>
    %c3 = arith.constant 3 : index
    %c0_14 = arith.constant 0 : index
    %14 = vector.load %arg0[%c3, %c0_14] : memref<22x192xf32, #tpu.memory_space<vmem>>, vector<8x192xf32>
    %c3_15 = arith.constant 3 : index
    %c0_16 = arith.constant 0 : index
    %c0_17 = arith.constant 0 : index
    %15 = vector.load %arg1[%c3_15, %c0_16, %c0_17] : memref<4x192x16xf32, #tpu.memory_space<vmem>>, vector<1x192x16xf32>
    %16 = vector.shape_cast %15 : vector<1x192x16xf32> to vector<192x16xf32>
    %cst_18 = arith.constant dense<0.000000e+00> : vector<8x16xf32>
    %17 = tpu.matmul %14, %16, %cst_18 {dimension_numbers = #tpu.dot_dimension_numbers<[1], [0], [0], [1], [0, 0, 1, 1], [], []>} : vector<8x192xf32>, vector<192x16xf32>, vector<8x16xf32> -> vector<8x16xf32>
    %18 = arith.addf %13, %17 : vector<8x16xf32>
    %c0_19 = arith.constant 0 : index
    %c0_20 = arith.constant 0 : index
    %19 = vector.load %arg10[%c0_19, %c0_20] : memref<18x64xf32, #tpu.memory_space<vmem>>, vector<8x16xf32>
    tpu.vector_store %arg10[%c0_19, %c0_20], %18 {strides = array<i32>} : memref<18x64xf32, #tpu.memory_space<vmem>>, vector<8x16xf32>,
    %c11 = arith.constant 11 : index
    %c0_21 = arith.constant 0 : index
    %20 = vector.load %arg0[%c11, %c0_21] : memref<22x192xf32, #tpu.memory_space<vmem>>, vector<8x192xf32>
    %c0_22 = arith.constant 0 : index
    %c0_23 = arith.constant 0 : index
    %c0_24 = arith.constant 0 : index
    %21 = vector.load %arg1[%c0_22, %c0_23, %c0_24] : memref<4x192x16xf32, #tpu.memory_space<vmem>>, vector<1x192x16xf32>
    %22 = vector.shape_cast %21 : vector<1x192x16xf32> to vector<192x16xf32>
    %cst_25 = arith.constant dense<0.000000e+00> : vector<8x16xf32>
    %23 = tpu.matmul %20, %22, %cst_25 {dimension_numbers = #tpu.dot_dimension_numbers<[1], [0], [0], [1], [0, 0, 1, 1], [], []>} : vector<8x192xf32>, vector<192x16xf32>, vector<8x16xf32> -> vector<8x16xf32>
    %c12 = arith.constant 12 : index
    %c0_26 = arith.constant 0 : index
    %24 = vector.load %arg0[%c12, %c0_26] : memref<22x192xf32, #tpu.memory_space<vmem>>, vector<8x192xf32>
    %c1_27 = arith.constant 1 : index
    %c0_28 = arith.constant 0 : index
    %c0_29 = arith.constant 0 : index
    %25 = vector.load %arg1[%c1_27, %c0_28, %c0_29] : memref<4x192x16xf32, #tpu.memory_space<vmem>>, vector<1x192x16xf32>
    %26 = vector.shape_cast %25 : vector<1x192x16xf32> to vector<192x16xf32>
    %cst_30 = arith.constant dense<0.000000e+00> : vector<8x16xf32>
    %27 = tpu.matmul %24, %26, %cst_30 {dimension_numbers = #tpu.dot_dimension_numbers<[1], [0], [0], [1], [0, 0, 1, 1], [], []>} : vector<8x192xf32>, vector<192x16xf32>, vector<8x16xf32> -> vector<8x16xf32>
    %28 = arith.addf %23, %27 : vector<8x16xf32>
    %c13 = arith.constant 13 : index
    %c0_31 = arith.constant 0 : index
    %29 = vector.load %arg0[%c13, %c0_31] : memref<22x192xf32, #tpu.memory_space<vmem>>, vector<8x192xf32>
    %c2_32 = arith.constant 2 : index
    %c0_33 = arith.constant 0 : index
    %c0_34 = arith.constant 0 : index
    %30 = vector.load %arg1[%c2_32, %c0_33, %c0_34] : memref<4x192x16xf32, #tpu.memory_space<vmem>>, vector<1x192x16xf32>
    %31 = vector.shape_cast %30 : vector<1x192x16xf32> to vector<192x16xf32>
    %cst_35 = arith.constant dense<0.000000e+00> : vector<8x16xf32>
    %32 = tpu.matmul %29, %31, %cst_35 {dimension_numbers = #tpu.dot_dimension_numbers<[1], [0], [0], [1], [0, 0, 1, 1], [], []>} : vector<8x192xf32>, vector<192x16xf32>, vector<8x16xf32> -> vector<8x16xf32>
    %33 = arith.addf %28, %32 : vector<8x16xf32>
    %c14 = arith.constant 14 : index
    %c0_36 = arith.constant 0 : index
    %34 = vector.load %arg0[%c14, %c0_36] : memref<22x192xf32, #tpu.memory_space<vmem>>, vector<8x192xf32>
    %c3_37 = arith.constant 3 : index
    %c0_38 = arith.constant 0 : index
    %c0_39 = arith.constant 0 : index
    %35 = vector.load %arg1[%c3_37, %c0_38, %c0_39] : memref<4x192x16xf32, #tpu.memory_space<vmem>>, vector<1x192x16xf32>
    %36 = vector.shape_cast %35 : vector<1x192x16xf32> to vector<192x16xf32>
    %cst_40 = arith.constant dense<0.000000e+00> : vector<8x16xf32>
    %37 = tpu.matmul %34, %36, %cst_40 {dimension_numbers = #tpu.dot_dimension_numbers<[1], [0], [0], [1], [0, 0, 1, 1], [], []>} : vector<8x192xf32>, vector<192x16xf32>, vector<8x16xf32> -> vector<8x16xf32>
    %38 = arith.addf %33, %37 : vector<8x16xf32>
    %c8 = arith.constant 8 : index
    %c0_41 = arith.constant 0 : index
    %39 = vector.load %arg10[%c8, %c0_41] : memref<18x64xf32, #tpu.memory_space<vmem>>, vector<8x16xf32>
    tpu.vector_store %arg10[%c8, %c0_41], %38 {strides = array<i32>} : memref<18x64xf32, #tpu.memory_space<vmem>>, vector<8x16xf32>,
    %c0_42 = arith.constant 0 : index
    %c0_43 = arith.constant 0 : index
    %40 = vector.load %arg10[%c0_42, %c0_43] : memref<18x64xf32, #tpu.memory_space<vmem>>, vector<16x16xf32>
    %c0_44 = arith.constant 0 : index
    %c0_45 = arith.constant 0 : index
    %41 = vector.load %arg6[%c0_44, %c0_45] : memref<10x64xf32, #tpu.memory_space<vmem>>, vector<1x16xf32>
    %c1_46 = arith.constant 1 : index
    %c0_47 = arith.constant 0 : index
    %42 = vector.load %arg6[%c1_46, %c0_47] : memref<10x64xf32, #tpu.memory_space<vmem>>, vector<1x16xf32>
    %cst_48 = arith.constant dense<0.000000e+00> : vector<16xf32>
    %43 = vector.multi_reduction <add>, %40, %cst_48 [0] : vector<16x16xf32> to vector<16xf32>
    %44 = vector.shape_cast %43 : vector<16xf32> to vector<1x16xf32>
    %cst_49 = arith.constant 1.600000e+01 : f32
    %45 = vector.broadcast %cst_49 : f32 to vector<1x16xf32>
    %46 = arith.divf %44, %45 : vector<1x16xf32>
    %47 = vector.broadcast %46 : vector<1x16xf32> to vector<16x16xf32>
    %48 = arith.subf %40, %47 : vector<16x16xf32>
    %49 = arith.mulf %48, %48 : vector<16x16xf32>
    %cst_50 = arith.constant dense<0.000000e+00> : vector<16xf32>
    %50 = vector.multi_reduction <add>, %49, %cst_50 [0] : vector<16x16xf32> to vector<16xf32>
    %51 = vector.shape_cast %50 : vector<16xf32> to vector<1x16xf32>
    %cst_51 = arith.constant 1.600000e+01 : f32
    %52 = vector.broadcast %cst_51 : f32 to vector<1x16xf32>
    %53 = arith.divf %51, %52 : vector<1x16xf32>
    %54 = vector.broadcast %46 : vector<1x16xf32> to vector<16x16xf32>
    %55 = arith.subf %40, %54 : vector<16x16xf32>
    %cst_52 = arith.constant 9.99999974E-6 : f32
    %56 = vector.broadcast %cst_52 : f32 to vector<1x16xf32>
    %57 = arith.addf %53, %56 : vector<1x16xf32>
    %58 = math.rsqrt %57 : vector<1x16xf32>
    %59 = vector.broadcast %58 : vector<1x16xf32> to vector<16x16xf32>
    %60 = arith.mulf %55, %59 : vector<16x16xf32>
    %61 = vector.broadcast %41 : vector<1x16xf32> to vector<16x16xf32>
    %62 = arith.mulf %60, %61 : vector<16x16xf32>
    %63 = vector.broadcast %42 : vector<1x16xf32> to vector<16x16xf32>
    %64 = arith.addf %62, %63 : vector<16x16xf32>
    %cst_53 = arith.constant 0.000000e+00 : f32
    %65 = vector.broadcast %cst_53 : f32 to vector<16x16xf32>
    %66 = arith.maximumf %64, %65 : vector<16x16xf32>
    %c0_54 = arith.constant 0 : index
    %c0_55 = arith.constant 0 : index
    %67 = vector.load %arg10[%c0_54, %c0_55] : memref<18x64xf32, #tpu.memory_space<vmem>>, vector<16x16xf32>
    tpu.vector_store %arg10[%c0_54, %c0_55], %66 {strides = array<i32>} : memref<18x64xf32, #tpu.memory_space<vmem>>, vector<16x16xf32>,
    %c0_56 = arith.constant 0 : index
    %c0_57 = arith.constant 0 : index
    %68 = tpu.strided_load %arg10[%c0_56, %c0_57] {strides = array<i32: 2, 1>} : memref<18x64xf32, #tpu.memory_space<vmem>>, vector<8x16xf32>
    %c1_58 = arith.constant 1 : index
    %c0_59 = arith.constant 0 : index
    %69 = tpu.strided_load %arg10[%c1_58, %c0_59] {strides = array<i32: 2, 1>} : memref<18x64xf32, #tpu.memory_space<vmem>>, vector<8x16xf32>
    %70 = arith.maximumf %68, %69 : vector<8x16xf32>
    %cst_60 = arith.constant 0.000000e+00 : f32
    %71 = vector.broadcast %cst_60 : f32 to vector<1x16xf32>
    %c1_61 = arith.constant 1 : index
    %c0_62 = arith.constant 0 : index
    %72 = vector.load %arg10[%c1_61, %c0_62] : memref<18x64xf32, #tpu.memory_space<vmem>>, vector<8x16xf32>
    tpu.vector_store %arg10[%c1_61, %c0_62], %70 {strides = array<i32>} : memref<18x64xf32, #tpu.memory_space<vmem>>, vector<8x16xf32>,
    %c0_63 = arith.constant 0 : index
    %c0_64 = arith.constant 0 : index
    %73 = vector.load %arg10[%c0_63, %c0_64] : memref<18x64xf32, #tpu.memory_space<vmem>>, vector<1x16xf32>
    tpu.vector_store %arg10[%c0_63, %c0_64], %71 {strides = array<i32>} : memref<18x64xf32, #tpu.memory_space<vmem>>, vector<1x16xf32>,
    %c9 = arith.constant 9 : index
    %c0_65 = arith.constant 0 : index
    %74 = vector.load %arg10[%c9, %c0_65] : memref<18x64xf32, #tpu.memory_space<vmem>>, vector<1x16xf32>
    tpu.vector_store %arg10[%c9, %c0_65], %71 {strides = array<i32>} : memref<18x64xf32, #tpu.memory_space<vmem>>, vector<1x16xf32>,
    %c0_66 = arith.constant 0 : index
    %c0_67 = arith.constant 0 : index
    %75 = vector.load %arg10[%c0_66, %c0_67] : memref<18x64xf32, #tpu.memory_space<vmem>>, vector<8x16xf32>
    %c1_68 = arith.constant 1 : index
    %c0_69 = arith.constant 0 : index
    %76 = vector.load %arg10[%c1_68, %c0_69] : memref<18x64xf32, #tpu.memory_space<vmem>>, vector<8x16xf32>
    %c2_70 = arith.constant 2 : index
    %c0_71 = arith.constant 0 : index
    %77 = vector.load %arg10[%c2_70, %c0_71] : memref<18x64xf32, #tpu.memory_space<vmem>>, vector<8x16xf32>
    %78 = tpu.iota {dimensions = array<i32: 0>} : vector<8x1xi32>
    %c3_i32 = arith.constant 3 : i32
    %79 = vector.broadcast %c3_i32 : i32 to vector<8x1xi32>
    %80 = arith.andi %78, %79 : vector<8x1xi32>
    %c0_i32 = arith.constant 0 : i32
    %81 = vector.broadcast %c0_i32 : i32 to vector<8x1xi32>
    %82 = arith.cmpi eq, %80, %81 : vector<8x1xi32>
    %cst_72 = arith.constant 0.000000e+00 : f32
    %83 = vector.shape_cast %82 : vector<8x1xi1> to vector<8x1xi1>
    %84 = vector.broadcast %83 : vector<8x1xi1> to vector<8x16xi1>
    %85 = vector.broadcast %cst_72 : f32 to vector<8x16xf32>
    %86 = arith.select %84, %85, %75 : vector<8x16xi1>, vector<8x16xf32>
    %c3_i32_73 = arith.constant 3 : i32
    %87 = vector.broadcast %c3_i32_73 : i32 to vector<8x1xi32>
    %88 = arith.cmpi eq, %80, %87 : vector<8x1xi32>
    %cst_74 = arith.constant 0.000000e+00 : f32
    %89 = vector.shape_cast %88 : vector<8x1xi1> to vector<8x1xi1>
    %90 = vector.broadcast %89 : vector<8x1xi1> to vector<8x16xi1>
    %91 = vector.broadcast %cst_74 : f32 to vector<8x16xf32>
    %92 = arith.select %90, %91, %77 : vector<8x16xi1>, vector<8x16xf32>
    %c0_75 = arith.constant 0 : index
    %c0_76 = arith.constant 0 : index
    %c0_77 = arith.constant 0 : index
    %93 = vector.load %arg2[%c0_75, %c0_76, %c0_77] : memref<3x16x32xf32, #tpu.memory_space<vmem>>, vector<1x16x32xf32>
    %94 = vector.shape_cast %93 : vector<1x16x32xf32> to vector<16x32xf32>
    %cst_78 = arith.constant dense<0.000000e+00> : vector<8x32xf32>
    %95 = tpu.matmul %86, %94, %cst_78 {dimension_numbers = #tpu.dot_dimension_numbers<[1], [0], [0], [1], [0, 0, 1, 1], [], []>} : vector<8x16xf32>, vector<16x32xf32>, vector<8x32xf32> -> vector<8x32xf32>
    %c1_79 = arith.constant 1 : index
    %c0_80 = arith.constant 0 : index
    %c0_81 = arith.constant 0 : index
    %96 = vector.load %arg2[%c1_79, %c0_80, %c0_81] : memref<3x16x32xf32, #tpu.memory_space<vmem>>, vector<1x16x32xf32>
    %97 = vector.shape_cast %96 : vector<1x16x32xf32> to vector<16x32xf32>
    %cst_82 = arith.constant dense<0.000000e+00> : vector<8x32xf32>
    %98 = tpu.matmul %76, %97, %cst_82 {dimension_numbers = #tpu.dot_dimension_numbers<[1], [0], [0], [1], [0, 0, 1, 1], [], []>} : vector<8x16xf32>, vector<16x32xf32>, vector<8x32xf32> -> vector<8x32xf32>
    %99 = arith.addf %95, %98 : vector<8x32xf32>
    %c2_83 = arith.constant 2 : index
    %c0_84 = arith.constant 0 : index
    %c0_85 = arith.constant 0 : index
    %100 = vector.load %arg2[%c2_83, %c0_84, %c0_85] : memref<3x16x32xf32, #tpu.memory_space<vmem>>, vector<1x16x32xf32>
    %101 = vector.shape_cast %100 : vector<1x16x32xf32> to vector<16x32xf32>
    %cst_86 = arith.constant dense<0.000000e+00> : vector<8x32xf32>
    %102 = tpu.matmul %92, %101, %cst_86 {dimension_numbers = #tpu.dot_dimension_numbers<[1], [0], [0], [1], [0, 0, 1, 1], [], []>} : vector<8x16xf32>, vector<16x32xf32>, vector<8x32xf32> -> vector<8x32xf32>
    %103 = arith.addf %99, %102 : vector<8x32xf32>
    %c2_87 = arith.constant 2 : index
    %c0_88 = arith.constant 0 : index
    %104 = vector.load %arg6[%c2_87, %c0_88] : memref<10x64xf32, #tpu.memory_space<vmem>>, vector<1x32xf32>
    %c3_89 = arith.constant 3 : index
    %c0_90 = arith.constant 0 : index
    %105 = vector.load %arg6[%c3_89, %c0_90] : memref<10x64xf32, #tpu.memory_space<vmem>>, vector<1x32xf32>
    %cst_91 = arith.constant dense<0.000000e+00> : vector<32xf32>
    %106 = vector.multi_reduction <add>, %103, %cst_91 [0] : vector<8x32xf32> to vector<32xf32>
    %107 = vector.shape_cast %106 : vector<32xf32> to vector<1x32xf32>
    %cst_92 = arith.constant 8.000000e+00 : f32
    %108 = vector.broadcast %cst_92 : f32 to vector<1x32xf32>
    %109 = arith.divf %107, %108 : vector<1x32xf32>
    %110 = vector.broadcast %109 : vector<1x32xf32> to vector<8x32xf32>
    %111 = arith.subf %103, %110 : vector<8x32xf32>
    %112 = arith.mulf %111, %111 : vector<8x32xf32>
    %cst_93 = arith.constant dense<0.000000e+00> : vector<32xf32>
    %113 = vector.multi_reduction <add>, %112, %cst_93 [0] : vector<8x32xf32> to vector<32xf32>
    %114 = vector.shape_cast %113 : vector<32xf32> to vector<1x32xf32>
    %cst_94 = arith.constant 8.000000e+00 : f32
    %115 = vector.broadcast %cst_94 : f32 to vector<1x32xf32>
    %116 = arith.divf %114, %115 : vector<1x32xf32>
    %117 = vector.broadcast %109 : vector<1x32xf32> to vector<8x32xf32>
    %118 = arith.subf %103, %117 : vector<8x32xf32>
    %cst_95 = arith.constant 9.99999974E-6 : f32
    %119 = vector.broadcast %cst_95 : f32 to vector<1x32xf32>
    %120 = arith.addf %116, %119 : vector<1x32xf32>
    %121 = math.rsqrt %120 : vector<1x32xf32>
    %122 = vector.broadcast %121 : vector<1x32xf32> to vector<8x32xf32>
    %123 = arith.mulf %118, %122 : vector<8x32xf32>
    %124 = vector.broadcast %104 : vector<1x32xf32> to vector<8x32xf32>
    %125 = arith.mulf %123, %124 : vector<8x32xf32>
    %126 = vector.broadcast %105 : vector<1x32xf32> to vector<8x32xf32>
    %127 = arith.addf %125, %126 : vector<8x32xf32>
    %cst_96 = arith.constant 0.000000e+00 : f32
    %128 = vector.broadcast %cst_96 : f32 to vector<8x32xf32>
    %129 = arith.maximumf %127, %128 : vector<8x32xf32>
    %c0_97 = arith.constant 0 : index
    %c0_98 = arith.constant 0 : index
    %130 = vector.load %arg10[%c0_97, %c0_98] : memref<18x64xf32, #tpu.memory_space<vmem>>, vector<8x32xf32>
    tpu.vector_store %arg10[%c0_97, %c0_98], %129 {strides = array<i32>} : memref<18x64xf32, #tpu.memory_space<vmem>>, vector<8x32xf32>,
    %c0_99 = arith.constant 0 : index
    %c0_100 = arith.constant 0 : index
    %131 = tpu.strided_load %arg10[%c0_99, %c0_100] {strides = array<i32: 2, 1>} : memref<18x64xf32, #tpu.memory_space<vmem>>, vector<4x32xf32>
    %c1_101 = arith.constant 1 : index
    %c0_102 = arith.constant 0 : index
    %132 = tpu.strided_load %arg10[%c1_101, %c0_102] {strides = array<i32: 2, 1>} : memref<18x64xf32, #tpu.memory_space<vmem>>, vector<4x32xf32>
    %133 = arith.maximumf %131, %132 : vector<4x32xf32>
    %cst_103 = arith.constant 0.000000e+00 : f32
    %134 = vector.broadcast %cst_103 : f32 to vector<1x32xf32>
    %c1_104 = arith.constant 1 : index
    %c0_105 = arith.constant 0 : index
    %135 = vector.load %arg10[%c1_104, %c0_105] : memref<18x64xf32, #tpu.memory_space<vmem>>, vector<4x32xf32>
    tpu.vector_store %arg10[%c1_104, %c0_105], %133 {strides = array<i32>} : memref<18x64xf32, #tpu.memory_space<vmem>>, vector<4x32xf32>,
    %c0_106 = arith.constant 0 : index
    %c0_107 = arith.constant 0 : index
    %136 = vector.load %arg10[%c0_106, %c0_107] : memref<18x64xf32, #tpu.memory_space<vmem>>, vector<1x32xf32>
    tpu.vector_store %arg10[%c0_106, %c0_107], %134 {strides = array<i32>} : memref<18x64xf32, #tpu.memory_space<vmem>>, vector<1x32xf32>,
    %c5 = arith.constant 5 : index
    %c0_108 = arith.constant 0 : index
    %137 = vector.load %arg10[%c5, %c0_108] : memref<18x64xf32, #tpu.memory_space<vmem>>, vector<1x32xf32>
    tpu.vector_store %arg10[%c5, %c0_108], %134 {strides = array<i32>} : memref<18x64xf32, #tpu.memory_space<vmem>>, vector<1x32xf32>,
    %c0_109 = arith.constant 0 : index
    %c0_110 = arith.constant 0 : index
    %138 = vector.load %arg10[%c0_109, %c0_110] : memref<18x64xf32, #tpu.memory_space<vmem>>, vector<4x32xf32>
    %c1_111 = arith.constant 1 : index
    %c0_112 = arith.constant 0 : index
    %139 = vector.load %arg10[%c1_111, %c0_112] : memref<18x64xf32, #tpu.memory_space<vmem>>, vector<4x32xf32>
    %c2_113 = arith.constant 2 : index
    %c0_114 = arith.constant 0 : index
    %140 = vector.load %arg10[%c2_113, %c0_114] : memref<18x64xf32, #tpu.memory_space<vmem>>, vector<4x32xf32>
    %141 = tpu.iota {dimensions = array<i32: 0>} : vector<4x1xi32>
    %c1_i32 = arith.constant 1 : i32
    %142 = vector.broadcast %c1_i32 : i32 to vector<4x1xi32>
    %143 = arith.andi %141, %142 : vector<4x1xi32>
    %c0_i32_115 = arith.constant 0 : i32
    %144 = vector.broadcast %c0_i32_115 : i32 to vector<4x1xi32>
    %145 = arith.cmpi eq, %143, %144 : vector<4x1xi32>
    %cst_116 = arith.constant 0.000000e+00 : f32
    %146 = vector.shape_cast %145 : vector<4x1xi1> to vector<4x1xi1>
    %147 = vector.broadcast %146 : vector<4x1xi1> to vector<4x32xi1>
    %148 = vector.broadcast %cst_116 : f32 to vector<4x32xf32>
    %149 = arith.select %147, %148, %138 : vector<4x32xi1>, vector<4x32xf32>
    %c1_i32_117 = arith.constant 1 : i32
    %150 = vector.broadcast %c1_i32_117 : i32 to vector<4x1xi32>
    %151 = arith.cmpi eq, %143, %150 : vector<4x1xi32>
    %cst_118 = arith.constant 0.000000e+00 : f32
    %152 = vector.shape_cast %151 : vector<4x1xi1> to vector<4x1xi1>
    %153 = vector.broadcast %152 : vector<4x1xi1> to vector<4x32xi1>
    %154 = vector.broadcast %cst_118 : f32 to vector<4x32xf32>
    %155 = arith.select %153, %154, %140 : vector<4x32xi1>, vector<4x32xf32>
    %c0_119 = arith.constant 0 : index
    %c0_120 = arith.constant 0 : index
    %c0_121 = arith.constant 0 : index
    %156 = vector.load %arg3[%c0_119, %c0_120, %c0_121] : memref<3x32x64xf32, #tpu.memory_space<vmem>>, vector<1x32x64xf32>
    %157 = vector.shape_cast %156 : vector<1x32x64xf32> to vector<32x64xf32>
    %cst_122 = arith.constant dense<0.000000e+00> : vector<4x64xf32>
    %158 = tpu.matmul %149, %157, %cst_122 {dimension_numbers = #tpu.dot_dimension_numbers<[1], [0], [0], [1], [0, 0, 1, 1], [], []>} : vector<4x32xf32>, vector<32x64xf32>, vector<4x64xf32> -> vector<4x64xf32>
    %c1_123 = arith.constant 1 : index
    %c0_124 = arith.constant 0 : index
    %c0_125 = arith.constant 0 : index
    %159 = vector.load %arg3[%c1_123, %c0_124, %c0_125] : memref<3x32x64xf32, #tpu.memory_space<vmem>>, vector<1x32x64xf32>
    %160 = vector.shape_cast %159 : vector<1x32x64xf32> to vector<32x64xf32>
    %cst_126 = arith.constant dense<0.000000e+00> : vector<4x64xf32>
    %161 = tpu.matmul %139, %160, %cst_126 {dimension_numbers = #tpu.dot_dimension_numbers<[1], [0], [0], [1], [0, 0, 1, 1], [], []>} : vector<4x32xf32>, vector<32x64xf32>, vector<4x64xf32> -> vector<4x64xf32>
    %162 = arith.addf %158, %161 : vector<4x64xf32>
    %c2_127 = arith.constant 2 : index
    %c0_128 = arith.constant 0 : index
    %c0_129 = arith.constant 0 : index
    %163 = vector.load %arg3[%c2_127, %c0_128, %c0_129] : memref<3x32x64xf32, #tpu.memory_space<vmem>>, vector<1x32x64xf32>
    %164 = vector.shape_cast %163 : vector<1x32x64xf32> to vector<32x64xf32>
    %cst_130 = arith.constant dense<0.000000e+00> : vector<4x64xf32>
    %165 = tpu.matmul %155, %164, %cst_130 {dimension_numbers = #tpu.dot_dimension_numbers<[1], [0], [0], [1], [0, 0, 1, 1], [], []>} : vector<4x32xf32>, vector<32x64xf32>, vector<4x64xf32> -> vector<4x64xf32>
    %166 = arith.addf %162, %165 : vector<4x64xf32>
    %c4 = arith.constant 4 : index
    %c0_131 = arith.constant 0 : index
    %167 = vector.load %arg6[%c4, %c0_131] : memref<10x64xf32, #tpu.memory_space<vmem>>, vector<1x64xf32>
    %c5_132 = arith.constant 5 : index
    %c0_133 = arith.constant 0 : index
    %168 = vector.load %arg6[%c5_132, %c0_133] : memref<10x64xf32, #tpu.memory_space<vmem>>, vector<1x64xf32>
    %cst_134 = arith.constant dense<0.000000e+00> : vector<64xf32>
    %169 = vector.multi_reduction <add>, %166, %cst_134 [0] : vector<4x64xf32> to vector<64xf32>
    %170 = vector.shape_cast %169 : vector<64xf32> to vector<1x64xf32>
    %cst_135 = arith.constant 4.000000e+00 : f32
    %171 = vector.broadcast %cst_135 : f32 to vector<1x64xf32>
    %172 = arith.divf %170, %171 : vector<1x64xf32>
    %173 = vector.broadcast %172 : vector<1x64xf32> to vector<4x64xf32>
    %174 = arith.subf %166, %173 : vector<4x64xf32>
    %175 = arith.mulf %174, %174 : vector<4x64xf32>
    %cst_136 = arith.constant dense<0.000000e+00> : vector<64xf32>
    %176 = vector.multi_reduction <add>, %175, %cst_136 [0] : vector<4x64xf32> to vector<64xf32>
    %177 = vector.shape_cast %176 : vector<64xf32> to vector<1x64xf32>
    %cst_137 = arith.constant 4.000000e+00 : f32
    %178 = vector.broadcast %cst_137 : f32 to vector<1x64xf32>
    %179 = arith.divf %177, %178 : vector<1x64xf32>
    %180 = vector.broadcast %172 : vector<1x64xf32> to vector<4x64xf32>
    %181 = arith.subf %166, %180 : vector<4x64xf32>
    %cst_138 = arith.constant 9.99999974E-6 : f32
    %182 = vector.broadcast %cst_138 : f32 to vector<1x64xf32>
    %183 = arith.addf %179, %182 : vector<1x64xf32>
    %184 = math.rsqrt %183 : vector<1x64xf32>
    %185 = vector.broadcast %184 : vector<1x64xf32> to vector<4x64xf32>
    %186 = arith.mulf %181, %185 : vector<4x64xf32>
    %187 = vector.broadcast %167 : vector<1x64xf32> to vector<4x64xf32>
    %188 = arith.mulf %186, %187 : vector<4x64xf32>
    %189 = vector.broadcast %168 : vector<1x64xf32> to vector<4x64xf32>
    %190 = arith.addf %188, %189 : vector<4x64xf32>
    %cst_139 = arith.constant 0.000000e+00 : f32
    %191 = vector.broadcast %cst_139 : f32 to vector<4x64xf32>
    %192 = arith.maximumf %190, %191 : vector<4x64xf32>
    %c0_140 = arith.constant 0 : index
    %c0_141 = arith.constant 0 : index
    %193 = vector.load %arg10[%c0_140, %c0_141] : memref<18x64xf32, #tpu.memory_space<vmem>>, vector<4x64xf32>
    tpu.vector_store %arg10[%c0_140, %c0_141], %192 {strides = array<i32>} : memref<18x64xf32, #tpu.memory_space<vmem>>, vector<4x64xf32>,
    %c0_142 = arith.constant 0 : index
    %c0_143 = arith.constant 0 : index
    %194 = tpu.strided_load %arg10[%c0_142, %c0_143] {strides = array<i32: 2, 1>} : memref<18x64xf32, #tpu.memory_space<vmem>>, vector<2x64xf32>
    %c1_144 = arith.constant 1 : index
    %c0_145 = arith.constant 0 : index
    %195 = tpu.strided_load %arg10[%c1_144, %c0_145] {strides = array<i32: 2, 1>} : memref<18x64xf32, #tpu.memory_space<vmem>>, vector<2x64xf32>
    %196 = arith.maximumf %194, %195 : vector<2x64xf32>
    %c0_146 = arith.constant 0 : index
    %c0_147 = arith.constant 0 : index
    %197 = vector.load %arg4[%c0_146, %c0_147] : memref<64x64xf32, #tpu.memory_space<vmem>>, vector<64x64xf32>
    %cst_148 = arith.constant dense<0.000000e+00> : vector<2x64xf32>
    %198 = tpu.matmul %196, %197, %cst_148 {dimension_numbers = #tpu.dot_dimension_numbers<[1], [0], [0], [1], [0, 0, 1, 1], [], []>} : vector<2x64xf32>, vector<64x64xf32>, vector<2x64xf32> -> vector<2x64xf32>
    %c6 = arith.constant 6 : index
    %c0_149 = arith.constant 0 : index
    %199 = vector.load %arg6[%c6, %c0_149] : memref<10x64xf32, #tpu.memory_space<vmem>>, vector<1x64xf32>
    %c7 = arith.constant 7 : index
    %c0_150 = arith.constant 0 : index
    %200 = vector.load %arg6[%c7, %c0_150] : memref<10x64xf32, #tpu.memory_space<vmem>>, vector<1x64xf32>
    %cst_151 = arith.constant dense<0.000000e+00> : vector<64xf32>
    %201 = vector.multi_reduction <add>, %198, %cst_151 [0] : vector<2x64xf32> to vector<64xf32>
    %202 = vector.shape_cast %201 : vector<64xf32> to vector<1x64xf32>
    %cst_152 = arith.constant 2.000000e+00 : f32
    %203 = vector.broadcast %cst_152 : f32 to vector<1x64xf32>
    %204 = arith.divf %202, %203 : vector<1x64xf32>
    %205 = vector.broadcast %204 : vector<1x64xf32> to vector<2x64xf32>
    %206 = arith.subf %198, %205 : vector<2x64xf32>
    %207 = arith.mulf %206, %206 : vector<2x64xf32>
    %cst_153 = arith.constant dense<0.000000e+00> : vector<64xf32>
    %208 = vector.multi_reduction <add>, %207, %cst_153 [0] : vector<2x64xf32> to vector<64xf32>
    %209 = vector.shape_cast %208 : vector<64xf32> to vector<1x64xf32>
    %cst_154 = arith.constant 2.000000e+00 : f32
    %210 = vector.broadcast %cst_154 : f32 to vector<1x64xf32>
    %211 = arith.divf %209, %210 : vector<1x64xf32>
    %212 = vector.broadcast %204 : vector<1x64xf32> to vector<2x64xf32>
    %213 = arith.subf %198, %212 : vector<2x64xf32>
    %cst_155 = arith.constant 9.99999974E-6 : f32
    %214 = vector.broadcast %cst_155 : f32 to vector<1x64xf32>
    %215 = arith.addf %211, %214 : vector<1x64xf32>
    %216 = math.rsqrt %215 : vector<1x64xf32>
    %217 = vector.broadcast %216 : vector<1x64xf32> to vector<2x64xf32>
    %218 = arith.mulf %213, %217 : vector<2x64xf32>
    %219 = vector.broadcast %199 : vector<1x64xf32> to vector<2x64xf32>
    %220 = arith.mulf %218, %219 : vector<2x64xf32>
    %221 = vector.broadcast %200 : vector<1x64xf32> to vector<2x64xf32>
    %222 = arith.addf %220, %221 : vector<2x64xf32>
    %cst_156 = arith.constant 0.000000e+00 : f32
    %223 = vector.broadcast %cst_156 : f32 to vector<2x64xf32>
    %224 = arith.maximumf %222, %223 : vector<2x64xf32>
    %c0_157 = arith.constant 0 : index
    %c0_158 = arith.constant 0 : index
    %225 = vector.load %arg5[%c0_157, %c0_158] : memref<64x64xf32, #tpu.memory_space<vmem>>, vector<64x64xf32>
    %cst_159 = arith.constant dense<0.000000e+00> : vector<2x64xf32>
    %226 = tpu.matmul %224, %225, %cst_159 {dimension_numbers = #tpu.dot_dimension_numbers<[1], [0], [0], [1], [0, 0, 1, 1], [], []>} : vector<2x64xf32>, vector<64x64xf32>, vector<2x64xf32> -> vector<2x64xf32>
    %c8_160 = arith.constant 8 : index
    %c0_161 = arith.constant 0 : index
    %227 = vector.load %arg6[%c8_160, %c0_161] : memref<10x64xf32, #tpu.memory_space<vmem>>, vector<1x64xf32>
    %c9_162 = arith.constant 9 : index
    %c0_163 = arith.constant 0 : index
    %228 = vector.load %arg6[%c9_162, %c0_163] : memref<10x64xf32, #tpu.memory_space<vmem>>, vector<1x64xf32>
    %cst_164 = arith.constant dense<0.000000e+00> : vector<64xf32>
    %229 = vector.multi_reduction <add>, %226, %cst_164 [0] : vector<2x64xf32> to vector<64xf32>
    %230 = vector.shape_cast %229 : vector<64xf32> to vector<1x64xf32>
    %cst_165 = arith.constant 2.000000e+00 : f32
    %231 = vector.broadcast %cst_165 : f32 to vector<1x64xf32>
    %232 = arith.divf %230, %231 : vector<1x64xf32>
    %233 = vector.broadcast %232 : vector<1x64xf32> to vector<2x64xf32>
    %234 = arith.subf %226, %233 : vector<2x64xf32>
    %235 = arith.mulf %234, %234 : vector<2x64xf32>
    %cst_166 = arith.constant dense<0.000000e+00> : vector<64xf32>
    %236 = vector.multi_reduction <add>, %235, %cst_166 [0] : vector<2x64xf32> to vector<64xf32>
    %237 = vector.shape_cast %236 : vector<64xf32> to vector<1x64xf32>
    %cst_167 = arith.constant 2.000000e+00 : f32
    %238 = vector.broadcast %cst_167 : f32 to vector<1x64xf32>
    %239 = arith.divf %237, %238 : vector<1x64xf32>
    %240 = vector.broadcast %232 : vector<1x64xf32> to vector<2x64xf32>
    %241 = arith.subf %226, %240 : vector<2x64xf32>
    %cst_168 = arith.constant 9.99999974E-6 : f32
    %242 = vector.broadcast %cst_168 : f32 to vector<1x64xf32>
    %243 = arith.addf %239, %242 : vector<1x64xf32>
    %244 = math.rsqrt %243 : vector<1x64xf32>
    %245 = vector.broadcast %244 : vector<1x64xf32> to vector<2x64xf32>
    %246 = arith.mulf %241, %245 : vector<2x64xf32>
    %247 = vector.broadcast %227 : vector<1x64xf32> to vector<2x64xf32>
    %248 = arith.mulf %246, %247 : vector<2x64xf32>
    %249 = vector.broadcast %228 : vector<1x64xf32> to vector<2x64xf32>
    %250 = arith.addf %248, %249 : vector<2x64xf32>
    %cst_169 = arith.constant 0.000000e+00 : f32
    %251 = vector.broadcast %cst_169 : f32 to vector<2x64xf32>
    %252 = arith.maximumf %250, %251 : vector<2x64xf32>
    %c0_170 = arith.constant 0 : index
    %c0_171 = arith.constant 0 : index
    %253 = vector.load %arg7[%c0_170, %c0_171] : memref<64x128xf32, #tpu.memory_space<vmem>>, vector<64x128xf32>
    %cst_172 = arith.constant dense<0.000000e+00> : vector<2x128xf32>
    %254 = tpu.matmul %252, %253, %cst_172 {dimension_numbers = #tpu.dot_dimension_numbers<[1], [0], [0], [1], [0, 0, 1, 1], [], []>} : vector<2x64xf32>, vector<64x128xf32>, vector<2x128xf32> -> vector<2x128xf32>
    %c0_173 = arith.constant 0 : index
    %c0_174 = arith.constant 0 : index
    %255 = vector.load %arg8[%c0_173, %c0_174] : memref<1x128xf32, #tpu.memory_space<vmem>>, vector<1x128xf32>
    %256 = vector.broadcast %255 : vector<1x128xf32> to vector<2x128xf32>
    %257 = arith.addf %254, %256 : vector<2x128xf32>
    %c0_175 = arith.constant 0 : index
    %c0_176 = arith.constant 0 : index
    %258 = vector.load %arg9[%c0_175, %c0_176] : memref<2x128xf32, #tpu.memory_space<vmem>>, vector<2x128xf32>
    tpu.vector_store %arg9[%c0_175, %c0_176], %257 {strides = array<i32>} : memref<2x128xf32, #tpu.memory_space<vmem>>, vector<2x128xf32>,
    return
  }
}

</mosaic_0001>

<llo_original>
// kernel: squeeze.6
$region0: #{squeeze.6}
  %s0 = inlined_call_operand.vmem [shape: f32[16,12,1,16], index: 0, kind: input, shape index: {}]
  %s1 = inlined_call_operand.vmem [shape: f32[16,192], index: 1, kind: output, shape index: {}]
  %v2 = vld [vmem:[%s0] ss:$8 sm:$0xf]
  %v3 = vld [vmem:[%s0] ss:$8 sm:$0xf0]
  %vm4 = vcmask 1047556
  %v5 = vsel %vm4, %v3, %v2
  %vm6 = vcmask 130048
  %7 = vst.msk [vmem:[%s1] ss:$8 sm:$0x3] %vm6, %v5
  %s8 = scalar_lea.vmem %s1, 4294967281
  %9 = vst.msk [vmem:[%s8] ss:$8 sm:$0xc] %vm6, %v5
  %s10 = scalar_lea.vmem %s1, 4294967266
  %11 = vst.msk [vmem:[%s10] ss:$8 sm:$0x30] %vm6, %v5
  %s12 = scalar_lea.vmem %s1, 4294967251
  %13 = vst.msk [vmem:[%s12] ss:$8 sm:$0xc0] %vm6, %v5
  %s14 = scalar_lea.vmem %s0, 64
  %v15 = vld [vmem:[%s14] ss:$8 sm:$0xf]
  %s16 = scalar_lea.vmem %s0, 64
  %v17 = vld [vmem:[%s16] ss:$8 sm:$0xf0]
  %vm18 = vcmask 1047556
  %v19 = vsel %vm18, %v17, %v15
  %vm20 = vcmask 130048
  %s21 = scalar_lea.vmem %s1, 4
  %22 = vst.msk [vmem:[%s21] ss:$8 sm:$0x3] %vm20, %v19
  %s23 = scalar_lea.vmem %s1, 4294967285
  %24 = vst.msk [vmem:[%s23] ss:$8 sm:$0xc] %vm20, %v19
  %s25 = scalar_lea.vmem %s1, 4294967270
  %26 = vst.msk [vmem:[%s25] ss:$8 sm:$0x30] %vm20, %v19
  %s27 = scalar_lea.vmem %s1, 4294967255
  %28 = vst.msk [vmem:[%s27] ss:$8 sm:$0xc0] %vm20, %v19
  %s29 = scalar_lea.vmem %s0, 128
  %v30 = vld [vmem:[%s29] ss:$8 sm:$0xf]
  %s31 = scalar_lea.vmem %s0, 128
  %v32 = vld [vmem:[%s31] ss:$8 sm:$0xf0]
  %vm33 = vcmask 1047556
  %v34 = vsel %vm33, %v32, %v30
  %vm35 = vcmask 130048
  %s36 = scalar_lea.vmem %s1, 16
  %37 = vst.msk [vmem:[%s36] ss:$8 sm:$0x3] %vm35, %v34
  %s38 = scalar_lea.vmem %s1, 1
  %39 = vst.msk [vmem:[%s38] ss:$8 sm:$0xc] %vm35, %v34
  %s40 = scalar_lea.vmem %s1, 4294967282
  %41 = vst.msk [vmem:[%s40] ss:$8 sm:$0x30] %vm35, %v34
  %s42 = scalar_lea.vmem %s1, 4294967267
  %43 = vst.msk [vmem:[%s42] ss:$8 sm:$0xc0] %vm35, %v34
  %s44 = scalar_lea.vmem %s0, 192
  %v45 = vld [vmem:[%s44] ss:$8 sm:$0xf]
  %s46 = scalar_lea.vmem %s0, 192
  %v47 = vld [vmem:[%s46] ss:$8 sm:$0xf0]
  %vm48 = vcmask 1047556
  %v49 = vsel %vm48, %v47, %v45
  %vm50 = vcmask 130048
  %s51 = scalar_lea.vmem %s1, 20
  %52 = vst.msk [vmem:[%s51] ss:$8 sm:$0x3] %vm50, %v49
  %s53 = scalar_lea.vmem %s1, 5
  %54 = vst.msk [vmem:[%s53] ss:$8 sm:$0xc] %vm50, %v49
  %s55 = scalar_lea.vmem %s1, 4294967286
  %56 = vst.msk [vmem:[%s55] ss:$8 sm:$0x30] %vm50, %v49
  %s57 = scalar_lea.vmem %s1, 4294967271
  %58 = vst.msk [vmem:[%s57] ss:$8 sm:$0xc0] %vm50, %v49
  %s59 = scalar_lea.vmem %s0, 7
  %s60 = smov 3
  %v61 = vld [vmem:[%s59] ss:$16 sm:%s60]
  %s62 = scalar_lea.vmem %s0, 7
  %s63 = smov 12
  %v64 = vld [vmem:[%s62] ss:$16 sm:%s63]
  %vm65 = vcmask 1043458
  %v66 = vsel %vm65, %v64, %v61
  %s67 = scalar_lea.vmem %s0, 7
  %s68 = smov 48
  %v69 = vld [vmem:[%s67] ss:$16 sm:%s68]
  %vm70 = vcmask 1045508
  %v71 = vsel %vm70, %v69, %v66
  %s72 = scalar_lea.vmem %s0, 7
  %s73 = smov 192
  %v74 = vld [vmem:[%s72] ss:$16 sm:%s73]
  %vm75 = vcmask 1047558
  %v76 = vsel %vm75, %v74, %v71
  %77 = vrot.lane.b32.xlu0 %v76, 112
  %v78 = vpop.permute.xlu0 %77
  %vm79 = vcmask 1048448
  %80 = vst.msk [vmem:[%s1] sm:$0xff] %vm79, %v78
  %s81 = scalar_lea.vmem %s0, 135
  %s82 = smov 3
  %v83 = vld [vmem:[%s81] ss:$16 sm:%s82]
  %s84 = scalar_lea.vmem %s0, 135
  %s85 = smov 12
  %v86 = vld [vmem:[%s84] ss:$16 sm:%s85]
  %vm87 = vcmask 1043458
  %v88 = vsel %vm87, %v86, %v83
  %s89 = scalar_lea.vmem %s0, 135
  %s90 = smov 48
  %v91 = vld [vmem:[%s89] ss:$16 sm:%s90]
  %vm92 = vcmask 1045508
  %v93 = vsel %vm92, %v91, %v88
  %s94 = scalar_lea.vmem %s0, 135
  %s95 = smov 192
  %v96 = vld [vmem:[%s94] ss:$16 sm:%s95]
  %vm97 = vcmask 1047558
  %v98 = vsel %vm97, %v96, %v93
  %99 = vrot.lane.b32.xlu0 %v98, 112
  %v100 = vpop.permute.xlu0 %99
  %vm101 = vcmask 1048448
  %s102 = scalar_lea.vmem %s1, 16
  %103 = vst.msk [vmem:[%s102] sm:$0xff] %vm101, %v100
  %s104 = scalar_lea.vmem %s0, 6
  %s105 = smov 3
  %v106 = vld [vmem:[%s104] ss:$16 sm:%s105]
  %s107 = scalar_lea.vmem %s0, 6
  %s108 = smov 12
  %v109 = vld [vmem:[%s107] ss:$16 sm:%s108]
  %vm110 = vcmask 1043458
  %v111 = vsel %vm110, %v109, %v106
  %s112 = scalar_lea.vmem %s0, 6
  %s113 = smov 48
  %v114 = vld [vmem:[%s112] ss:$16 sm:%s113]
  %vm115 = vcmask 1045508
  %v116 = vsel %vm115, %v114, %v111
  %s117 = scalar_lea.vmem %s0, 6
  %s118 = smov 192
  %v119 = vld [vmem:[%s117] ss:$16 sm:%s118]
  %vm120 = vcmask 1047558
  %v121 = vsel %vm120, %v119, %v116
  %122 = vrot.lane.b32.xlu0 %v121, 96
  %v123 = vpop.permute.xlu0 %122
  %vm124 = vcmask 917248
  %125 = vst.msk [vmem:[%s1] sm:$0xff] %vm124, %v123
  %s126 = scalar_lea.vmem %s0, 134
  %s127 = smov 3
  %v128 = vld [vmem:[%s126] ss:$16 sm:%s127]
  %s129 = scalar_lea.vmem %s0, 134
  %s130 = smov 12
  %v131 = vld [vmem:[%s129] ss:$16 sm:%s130]
  %vm132 = vcmask 1043458
  %v133 = vsel %vm132, %v131, %v128
  %s134 = scalar_lea.vmem %s0, 134
  %s135 = smov 48
  %v136 = vld [vmem:[%s134] ss:$16 sm:%s135]
  %vm137 = vcmask 1045508
  %v138 = vsel %vm137, %v136, %v133
  %s139 = scalar_lea.vmem %s0, 134
  %s140 = smov 192
  %v141 = vld [vmem:[%s139] ss:$16 sm:%s140]
  %vm142 = vcmask 1047558
  %v143 = vsel %vm142, %v141, %v138
  %144 = vrot.lane.b32.xlu0 %v143, 96
  %v145 = vpop.permute.xlu0 %144
  %vm146 = vcmask 917248
  %s147 = scalar_lea.vmem %s1, 16
  %148 = vst.msk [vmem:[%s147] sm:$0xff] %vm146, %v145
  %s149 = scalar_lea.vmem %s0, 5
  %s150 = smov 3
  %v151 = vld [vmem:[%s149] ss:$16 sm:%s150]
  %s152 = scalar_lea.vmem %s0, 5
  %s153 = smov 12
  %v154 = vld [vmem:[%s152] ss:$16 sm:%s153]
  %vm155 = vcmask 1043458
  %v156 = vsel %vm155, %v154, %v151
  %s157 = scalar_lea.vmem %s0, 5
  %s158 = smov 48
  %v159 = vld [vmem:[%s157] ss:$16 sm:%s158]
  %vm160 = vcmask 1045508
  %v161 = vsel %vm160, %v159, %v156
  %s162 = scalar_lea.vmem %s0, 5
  %s163 = smov 192
  %v164 = vld [vmem:[%s162] ss:$16 sm:%s163]
  %vm165 = vcmask 1047558
  %v166 = vsel %vm165, %v164, %v161
  %167 = vrot.lane.b32.xlu0 %v166, 80
  %v168 = vpop.permute.xlu0 %167
  %vm169 = vcmask 786048
  %170 = vst.msk [vmem:[%s1] sm:$0xff] %vm169, %v168
  %s171 = scalar_lea.vmem %s0, 133
  %s172 = smov 3
  %v173 = vld [vmem:[%s171] ss:$16 sm:%s172]
  %s174 = scalar_lea.vmem %s0, 133
  %s175 = smov 12
  %v176 = vld [vmem:[%s174] ss:$16 sm:%s175]
  %vm177 = vcmask 1043458
  %v178 = vsel %vm177, %v176, %v173
  %s179 = scalar_lea.vmem %s0, 133
  %s180 = smov 48
  %v181 = vld [vmem:[%s179] ss:$16 sm:%s180]
  %vm182 = vcmask 1045508
  %v183 = vsel %vm182, %v181, %v178
  %s184 = scalar_lea.vmem %s0, 133
  %s185 = smov 192
  %v186 = vld [vmem:[%s184] ss:$16 sm:%s185]
  %vm187 = vcmask 1047558
  %v188 = vsel %vm187, %v186, %v183
  %189 = vrot.lane.b32.xlu0 %v188, 80
  %v190 = vpop.permute.xlu0 %189
  %vm191 = vcmask 786048
  %s192 = scalar_lea.vmem %s1, 16
  %193 = vst.msk [vmem:[%s192] sm:$0xff] %vm191, %v190
  %s194 = scalar_lea.vmem %s0, 4
  %s195 = smov 3
  %v196 = vld [vmem:[%s194] ss:$16 sm:%s195]
  %s197 = scalar_lea.vmem %s0, 4
  %s198 = smov 12
  %v199 = vld [vmem:[%s197] ss:$16 sm:%s198]
  %vm200 = vcmask 1043458
  %v201 = vsel %vm200, %v199, %v196
  %s202 = scalar_lea.vmem %s0, 4
  %s203 = smov 48
  %v204 = vld [vmem:[%s202] ss:$16 sm:%s203]
  %vm205 = vcmask 1045508
  %v206 = vsel %vm205, %v204, %v201
  %s207 = scalar_lea.vmem %s0, 4
  %s208 = smov 192
  %v209 = vld [vmem:[%s207] ss:$16 sm:%s208]
  %vm210 = vcmask 1047558
  %v211 = vsel %vm210, %v209, %v206
  %212 = vrot.lane.b32.xlu0 %v211, 64
  %v213 = vpop.permute.xlu0 %212
  %vm214 = vcmask 654848
  %215 = vst.msk [vmem:[%s1] sm:$0xff] %vm214, %v213
  %s216 = scalar_lea.vmem %s0, 132
  %s217 = smov 3
  %v218 = vld [vmem:[%s216] ss:$16 sm:%s217]
  %s219 = scalar_lea.vmem %s0, 132
  %s220 = smov 12
  %v221 = vld [vmem:[%s219] ss:$16 sm:%s220]
  %vm222 = vcmask 1043458
  %v223 = vsel %vm222, %v221, %v218
  %s224 = scalar_lea.vmem %s0, 132
  %s225 = smov 48
  %v226 = vld [vmem:[%s224] ss:$16 sm:%s225]
  %vm227 = vcmask 1045508
  %v228 = vsel %vm227, %v226, %v223
  %s229 = scalar_lea.vmem %s0, 132
  %s230 = smov 192
  %v231 = vld [vmem:[%s229] ss:$16 sm:%s230]
  %vm232 = vcmask 1047558
  %v233 = vsel %vm232, %v231, %v228
  %234 = vrot.lane.b32.xlu0 %v233, 64
  %v235 = vpop.permute.xlu0 %234
  %vm236 = vcmask 654848
  %s237 = scalar_lea.vmem %s1, 16
  %238 = vst.msk [vmem:[%s237] sm:$0xff] %vm236, %v235
  %s239 = scalar_lea.vmem %s0, 3
  %s240 = smov 3
  %v241 = vld [vmem:[%s239] ss:$16 sm:%s240]
  %s242 = scalar_lea.vmem %s0, 3
  %s243 = smov 12
  %v244 = vld [vmem:[%s242] ss:$16 sm:%s243]
  %vm245 = vcmask 1043458
  %v246 = vsel %vm245, %v244, %v241
  %s247 = scalar_lea.vmem %s0, 3
  %s248 = smov 48
  %v249 = vld [vmem:[%s247] ss:$16 sm:%s248]
  %vm250 = vcmask 1045508
  %v251 = vsel %vm250, %v249, %v246
  %s252 = scalar_lea.vmem %s0, 3
  %s253 = smov 192
  %v254 = vld [vmem:[%s252] ss:$16 sm:%s253]
  %vm255 = vcmask 1047558
  %v256 = vsel %vm255, %v254, %v251
  %257 = vrot.lane.b32.xlu0 %v256, 48
  %v258 = vpop.permute.xlu0 %257
  %vm259 = vcmask 523648
  %260 = vst.msk [vmem:[%s1] sm:$0xff] %vm259, %v258
  %s261 = scalar_lea.vmem %s0, 11
  %s262 = smov 3
  %v263 = vld [vmem:[%s261] ss:$16 sm:%s262]
  %s264 = scalar_lea.vmem %s0, 11
  %s265 = smov 12
  %v266 = vld [vmem:[%s264] ss:$16 sm:%s265]
  %vm267 = vcmask 1043458
  %v268 = vsel %vm267, %v266, %v263
  %s269 = scalar_lea.vmem %s0, 11
  %s270 = smov 48
  %v271 = vld [vmem:[%s269] ss:$16 sm:%s270]
  %vm272 = vcmask 1045508
  %v273 = vsel %vm272, %v271, %v268
  %s274 = scalar_lea.vmem %s0, 11
  %s275 = smov 192
  %v276 = vld [vmem:[%s274] ss:$16 sm:%s275]
  %vm277 = vcmask 1047558
  %v278 = vsel %vm277, %v276, %v273
  %279 = vrot.lane.b32.xlu0 %v278, 48
  %v280 = vpop.permute.xlu0 %279
  %vm281 = vcmask 523648
  %s282 = scalar_lea.vmem %s1, 8
  %283 = vst.msk [vmem:[%s282] sm:$0xff] %vm281, %v280
  %s284 = scalar_lea.vmem %s0, 131
  %s285 = smov 3
  %v286 = vld [vmem:[%s284] ss:$16 sm:%s285]
  %s287 = scalar_lea.vmem %s0, 131
  %s288 = smov 12
  %v289 = vld [vmem:[%s287] ss:$16 sm:%s288]
  %vm290 = vcmask 1043458
  %v291 = vsel %vm290, %v289, %v286
  %s292 = scalar_lea.vmem %s0, 131
  %s293 = smov 48
  %v294 = vld [vmem:[%s292] ss:$16 sm:%s293]
  %vm295 = vcmask 1045508
  %v296 = vsel %vm295, %v294, %v291
  %s297 = scalar_lea.vmem %s0, 131
  %s298 = smov 192
  %v299 = vld [vmem:[%s297] ss:$16 sm:%s298]
  %vm300 = vcmask 1047558
  %v301 = vsel %vm300, %v299, %v296
  %302 = vrot.lane.b32.xlu0 %v301, 48
  %v303 = vpop.permute.xlu0 %302
  %vm304 = vcmask 523648
  %s305 = scalar_lea.vmem %s1, 16
  %306 = vst.msk [vmem:[%s305] sm:$0xff] %vm304, %v303
  %s307 = scalar_lea.vmem %s0, 139
  %s308 = smov 3
  %v309 = vld [vmem:[%s307] ss:$16 sm:%s308]
  %s310 = scalar_lea.vmem %s0, 139
  %s311 = smov 12
  %v312 = vld [vmem:[%s310] ss:$16 sm:%s311]
  %vm313 = vcmask 1043458
  %v314 = vsel %vm313, %v312, %v309
  %s315 = scalar_lea.vmem %s0, 139
  %s316 = smov 48
  %v317 = vld [vmem:[%s315] ss:$16 sm:%s316]
  %vm318 = vcmask 1045508
  %v319 = vsel %vm318, %v317, %v314
  %s320 = scalar_lea.vmem %s0, 139
  %s321 = smov 192
  %v322 = vld [vmem:[%s320] ss:$16 sm:%s321]
  %vm323 = vcmask 1047558
  %v324 = vsel %vm323, %v322, %v319
  %325 = vrot.lane.b32.xlu0 %v324, 48
  %v326 = vpop.permute.xlu0 %325
  %vm327 = vcmask 523648
  %s328 = scalar_lea.vmem %s1, 24
  %329 = vst.msk [vmem:[%s328] sm:$0xff] %vm327, %v326
  %s330 = scalar_lea.vmem %s0, 2
  %s331 = smov 3
  %v332 = vld [vmem:[%s330] ss:$16 sm:%s331]
  %s333 = scalar_lea.vmem %s0, 2
  %s334 = smov 12
  %v335 = vld [vmem:[%s333] ss:$16 sm:%s334]
  %vm336 = vcmask 1043458
  %v337 = vsel %vm336, %v335, %v332
  %s338 = scalar_lea.vmem %s0, 2
  %s339 = smov 48
  %v340 = vld [vmem:[%s338] ss:$16 sm:%s339]
  %vm341 = vcmask 1045508
  %v342 = vsel %vm341, %v340, %v337
  %s343 = scalar_lea.vmem %s0, 2
  %s344 = smov 192
  %v345 = vld [vmem:[%s343] ss:$16 sm:%s344]
  %vm346 = vcmask 1047558
  %v347 = vsel %vm346, %v345, %v342
  %348 = vrot.lane.b32.xlu0 %v347, 32
  %v349 = vpop.permute.xlu0 %348
  %vm350 = vcmask 392448
  %351 = vst.msk [vmem:[%s1] sm:$0xff] %vm350, %v349
  %s352 = scalar_lea.vmem %s0, 10
  %s353 = smov 3
  %v354 = vld [vmem:[%s352] ss:$16 sm:%s353]
  %s355 = scalar_lea.vmem %s0, 10
  %s356 = smov 12
  %v357 = vld [vmem:[%s355] ss:$16 sm:%s356]
  %vm358 = vcmask 1043458
  %v359 = vsel %vm358, %v357, %v354
  %s360 = scalar_lea.vmem %s0, 10
  %s361 = smov 48
  %v362 = vld [vmem:[%s360] ss:$16 sm:%s361]
  %vm363 = vcmask 1045508
  %v364 = vsel %vm363, %v362, %v359
  %s365 = scalar_lea.vmem %s0, 10
  %s366 = smov 192
  %v367 = vld [vmem:[%s365] ss:$16 sm:%s366]
  %vm368 = vcmask 1047558
  %v369 = vsel %vm368, %v367, %v364
  %370 = vrot.lane.b32.xlu0 %v369, 32
  %v371 = vpop.permute.xlu0 %370
  %vm372 = vcmask 392448
  %s373 = scalar_lea.vmem %s1, 8
  %374 = vst.msk [vmem:[%s373] sm:$0xff] %vm372, %v371
  %s375 = scalar_lea.vmem %s0, 130
  %s376 = smov 3
  %v377 = vld [vmem:[%s375] ss:$16 sm:%s376]
  %s378 = scalar_lea.vmem %s0, 130
  %s379 = smov 12
  %v380 = vld [vmem:[%s378] ss:$16 sm:%s379]
  %vm381 = vcmask 1043458
  %v382 = vsel %vm381, %v380, %v377
  %s383 = scalar_lea.vmem %s0, 130
  %s384 = smov 48
  %v385 = vld [vmem:[%s383] ss:$16 sm:%s384]
  %vm386 = vcmask 1045508
  %v387 = vsel %vm386, %v385, %v382
  %s388 = scalar_lea.vmem %s0, 130
  %s389 = smov 192
  %v390 = vld [vmem:[%s388] ss:$16 sm:%s389]
  %vm391 = vcmask 1047558
  %v392 = vsel %vm391, %v390, %v387
  %393 = vrot.lane.b32.xlu0 %v392, 32
  %v394 = vpop.permute.xlu0 %393
  %vm395 = vcmask 392448
  %s396 = scalar_lea.vmem %s1, 16
  %397 = vst.msk [vmem:[%s396] sm:$0xff] %vm395, %v394
  %s398 = scalar_lea.vmem %s0, 138
  %s399 = smov 3
  %v400 = vld [vmem:[%s398] ss:$16 sm:%s399]
  %s401 = scalar_lea.vmem %s0, 138
  %s402 = smov 12
  %v403 = vld [vmem:[%s401] ss:$16 sm:%s402]
  %vm404 = vcmask 1043458
  %v405 = vsel %vm404, %v403, %v400
  %s406 = scalar_lea.vmem %s0, 138
  %s407 = smov 48
  %v408 = vld [vmem:[%s406] ss:$16 sm:%s407]
  %vm409 = vcmask 1045508
  %v410 = vsel %vm409, %v408, %v405
  %s411 = scalar_lea.vmem %s0, 138
  %s412 = smov 192
  %v413 = vld [vmem:[%s411] ss:$16 sm:%s412]
  %vm414 = vcmask 1047558
  %v415 = vsel %vm414, %v413, %v410
  %416 = vrot.lane.b32.xlu0 %v415, 32
  %v417 = vpop.permute.xlu0 %416
  %vm418 = vcmask 392448
  %s419 = scalar_lea.vmem %s1, 24
  %420 = vst.msk [vmem:[%s419] sm:$0xff] %vm418, %v417
  %s421 = scalar_lea.vmem %s0, 1
  %s422 = smov 3
  %v423 = vld [vmem:[%s421] ss:$16 sm:%s422]
  %s424 = scalar_lea.vmem %s0, 1
  %s425 = smov 12
  %v426 = vld [vmem:[%s424] ss:$16 sm:%s425]
  %vm427 = vcmask 1043458
  %v428 = vsel %vm427, %v426, %v423
  %s429 = scalar_lea.vmem %s0, 1
  %s430 = smov 48
  %v431 = vld [vmem:[%s429] ss:$16 sm:%s430]
  %vm432 = vcmask 1045508
  %v433 = vsel %vm432, %v431, %v428
  %s434 = scalar_lea.vmem %s0, 1
  %s435 = smov 192
  %v436 = vld [vmem:[%s434] ss:$16 sm:%s435]
  %vm437 = vcmask 1047558
  %v438 = vsel %vm437, %v436, %v433
  %439 = vrot.lane.b32.xlu0 %v438, 16
  %v440 = vpop.permute.xlu0 %439
  %vm441 = vcmask 261248
  %442 = vst.msk [vmem:[%s1] sm:$0xff] %vm441, %v440
  %s443 = scalar_lea.vmem %s0, 9
  %s444 = smov 3
  %v445 = vld [vmem:[%s443] ss:$16 sm:%s444]
  %s446 = scalar_lea.vmem %s0, 9
  %s447 = smov 12
  %v448 = vld [vmem:[%s446] ss:$16 sm:%s447]
  %vm449 = vcmask 1043458
  %v450 = vsel %vm449, %v448, %v445
  %s451 = scalar_lea.vmem %s0, 9
  %s452 = smov 48
  %v453 = vld [vmem:[%s451] ss:$16 sm:%s452]
  %vm454 = vcmask 1045508
  %v455 = vsel %vm454, %v453, %v450
  %s456 = scalar_lea.vmem %s0, 9
  %s457 = smov 192
  %v458 = vld [vmem:[%s456] ss:$16 sm:%s457]
  %vm459 = vcmask 1047558
  %v460 = vsel %vm459, %v458, %v455
  %461 = vrot.lane.b32.xlu0 %v460, 16
  %v462 = vpop.permute.xlu0 %461
  %vm463 = vcmask 261248
  %s464 = scalar_lea.vmem %s1, 8
  %465 = vst.msk [vmem:[%s464] sm:$0xff] %vm463, %v462
  %s466 = scalar_lea.vmem %s0, 129
  %s467 = smov 3
  %v468 = vld [vmem:[%s466] ss:$16 sm:%s467]
  %s469 = scalar_lea.vmem %s0, 129
  %s470 = smov 12
  %v471 = vld [vmem:[%s469] ss:$16 sm:%s470]
  %vm472 = vcmask 1043458
  %v473 = vsel %vm472, %v471, %v468
  %s474 = scalar_lea.vmem %s0, 129
  %s475 = smov 48
  %v476 = vld [vmem:[%s474] ss:$16 sm:%s475]
  %vm477 = vcmask 1045508
  %v478 = vsel %vm477, %v476, %v473
  %s479 = scalar_lea.vmem %s0, 129
  %s480 = smov 192
  %v481 = vld [vmem:[%s479] ss:$16 sm:%s480]
  %vm482 = vcmask 1047558
  %v483 = vsel %vm482, %v481, %v478
  %484 = vrot.lane.b32.xlu0 %v483, 16
  %v485 = vpop.permute.xlu0 %484
  %vm486 = vcmask 261248
  %s487 = scalar_lea.vmem %s1, 16
  %488 = vst.msk [vmem:[%s487] sm:$0xff] %vm486, %v485
  %s489 = scalar_lea.vmem %s0, 137
  %s490 = smov 3
  %v491 = vld [vmem:[%s489] ss:$16 sm:%s490]
  %s492 = scalar_lea.vmem %s0, 137
  %s493 = smov 12
  %v494 = vld [vmem:[%s492] ss:$16 sm:%s493]
  %vm495 = vcmask 1043458
  %v496 = vsel %vm495, %v494, %v491
  %s497 = scalar_lea.vmem %s0, 137
  %s498 = smov 48
  %v499 = vld [vmem:[%s497] ss:$16 sm:%s498]
  %vm500 = vcmask 1045508
  %v501 = vsel %vm500, %v499, %v496
  %s502 = scalar_lea.vmem %s0, 137
  %s503 = smov 192
  %v504 = vld [vmem:[%s502] ss:$16 sm:%s503]
  %vm505 = vcmask 1047558
  %v506 = vsel %vm505, %v504, %v501
  %507 = vrot.lane.b32.xlu0 %v506, 16
  %v508 = vpop.permute.xlu0 %507
  %vm509 = vcmask 261248
  %s510 = scalar_lea.vmem %s1, 24
  %511 = vst.msk [vmem:[%s510] sm:$0xff] %vm509, %v508

// kernel: wdcnn_forward.1
$region0: #{wdcnn_forward.1}
  #allocation0 [shape = 'u32[]', space=smem, size = 0x4, offset = 0x4, fixed_abs, tag = 'smem constant byte address 0x4 - core index']
  #allocation1 [shape = 'u32[144,128]{1,0:T(1,128)}', space=vmem, size = 0x12000, scoped, tag = 'internal scratch']
  #allocation2 [shape = 'f32[18,64]{1,0:T(8,128)}', space=vmem, size = 0x3000, scoped, tag = 'scratch operand']
  %s0 = inlined_call_operand.vmem [shape: f32[22,192], index: 0, kind: input, shape index: {}]
  %s1 = inlined_call_operand.vmem [shape: f32[4,192,16], index: 1, kind: input, shape index: {}]
  %s2 = inlined_call_operand.vmem [shape: f32[3,16,32], index: 2, kind: input, shape index: {}]
  %s3 = inlined_call_operand.vmem [shape: f32[3,32,64], index: 3, kind: input, shape index: {}]
  %s4 = inlined_call_operand.vmem [shape: f32[64,64], index: 4, kind: input, shape index: {}]
  %s5 = inlined_call_operand.vmem [shape: f32[64,64], index: 5, kind: input, shape index: {}]
  %s6 = inlined_call_operand.vmem [shape: f32[10,64], index: 6, kind: input, shape index: {}]
  %s7 = inlined_call_operand.vmem [shape: f32[64,128], index: 7, kind: input, shape index: {}]
  %s8 = inlined_call_operand.vmem [shape: f32[1,128], index: 8, kind: input, shape index: {}]
  %s9 = inlined_call_operand.hbm [shape: f32[2,128], index: 9, kind: output, shape index: {}]
  %s10 = sld [smem:[#allocation0]]
  $region46: #{wdcnn_forward.1} parent=0
    _
  %s12 = ssub.s32 1, %s10
  %s13 = scalar_select 0, %s12, %s10
  $region1: #{wdcnn_forward.1} parent=0
    #allocation3 [shape = 'u8[1024]{0}', space=vmem, size = 0x400, scoped, tag = 'output window, operand 0, single buffered']
    #allocation4 [shape = 's32[1]{0}', space=sflag, size = 0x4, scoped, tag = 'scoped memory for wdcnn_forward.1']
    %14 = vsyncpa [#allocation4], 0
    // Predicated region
    $region2: #{wdcnn_forward.1} parent=1 // pred_check
      _
    $region3: #{wdcnn_forward.1} parent=1 // pred_check_branch
      %16 = sbr.rel (0) target = $region5
    $region4: #{wdcnn_forward.1} parent=1 // pred_region
      _
    $region5: #{wdcnn_forward.1} parent=1 // pred_fallthru
      _
    // Predicated region
    $region6: #{wdcnn_forward.1} parent=1 // pred_check
      _
    $region7: #{wdcnn_forward.1} parent=1 // pred_check_branch
      %18 = sbr.rel (0) target = $region9
    $region8: #{wdcnn_forward.1} parent=1 // pred_region
      _
    $region9: #{wdcnn_forward.1} parent=1 // pred_fallthru
      _
    // Predicated region
    $region10: #{wdcnn_forward.1} parent=1 // pred_check
      _
    $region11: #{wdcnn_forward.1} parent=1 // pred_check_branch
      %20 = sbr.rel (0) target = $region13
    $region12: #{wdcnn_forward.1} parent=1 // pred_region
      _
    $region13: #{wdcnn_forward.1} parent=1 // pred_fallthru
      _
    // Predicated region
    $region14: #{wdcnn_forward.1} parent=1 // pred_check
      _
    $region15: #{wdcnn_forward.1} parent=1 // pred_check_branch
      %22 = sbr.rel (0) target = $region17
    $region16: #{wdcnn_forward.1} parent=1 // pred_region
      _
    $region17: #{wdcnn_forward.1} parent=1 // pred_fallthru
      _
    // Predicated region
    $region18: #{wdcnn_forward.1} parent=1 // pred_check
      _
    $region19: #{wdcnn_forward.1} parent=1 // pred_check_branch
      %24 = sbr.rel (0) target = $region21
    $region20: #{wdcnn_forward.1} parent=1 // pred_region
      _
    $region21: #{wdcnn_forward.1} parent=1 // pred_fallthru
      _
    // Predicated region
    $region22: #{wdcnn_forward.1} parent=1 // pred_check
      _
    $region23: #{wdcnn_forward.1} parent=1 // pred_check_branch
      %26 = sbr.rel (0) target = $region25
    $region24: #{wdcnn_forward.1} parent=1 // pred_region
      _
    $region25: #{wdcnn_forward.1} parent=1 // pred_fallthru
      _
    // Predicated region
    $region26: #{wdcnn_forward.1} parent=1 // pred_check
      _
    $region27: #{wdcnn_forward.1} parent=1 // pred_check_branch
      %28 = sbr.rel (0) target = $region29
    $region28: #{wdcnn_forward.1} parent=1 // pred_region
      _
    $region29: #{wdcnn_forward.1} parent=1 // pred_fallthru
      _
    // Predicated region
    $region30: #{wdcnn_forward.1} parent=1 // pred_check
      _
    $region31: #{wdcnn_forward.1} parent=1 // pred_check_branch
      %30 = sbr.rel (0) target = $region33
    $region32: #{wdcnn_forward.1} parent=1 // pred_region
      _
    $region33: #{wdcnn_forward.1} parent=1 // pred_fallthru
      _
    // Predicated region
    $region34: #{wdcnn_forward.1} parent=1 // pred_check
      _
    $region35: #{wdcnn_forward.1} parent=1 // pred_check_branch
      %32 = sbr.rel (0) target = $region37
    $region36: #{wdcnn_forward.1} parent=1 // pred_region
      _
    $region37: #{wdcnn_forward.1} parent=1 // pred_fallthru
      _
    %v33 = vld [vmem:[%s0] sm:$0xff]
    %v34 = vld [vmem:[%s0 + $0x8] sm:$0xff]
    %v35 = vld [vmem:[%s1] sm:$0xff]
    %v36 = vld [vmem:[%s1 + $0x8] sm:$0xff]
    %v37 = vld [vmem:[%s1 + $0x10] sm:$0xff]
    %v38 = vld [vmem:[%s1 + $0x18] sm:$0xff]
    %v39 = vld [vmem:[%s1 + $0x20] sm:$0xff]
    %v40 = vld [vmem:[%s1 + $0x28] sm:$0xff]
    %v41 = vld [vmem:[%s1 + $0x30] sm:$0xff]
    %v42 = vld [vmem:[%s1 + $0x38] sm:$0xff]
    %v43 = vld [vmem:[%s1 + $0x40] sm:$0xff]
    %v44 = vld [vmem:[%s1 + $0x48] sm:$0xff]
    %v45 = vld [vmem:[%s1 + $0x50] sm:$0xff]
    %v46 = vld [vmem:[%s1 + $0x58] sm:$0xff]
    %v47 = vld [vmem:[%s1 + $0x60] sm:$0xff]
    %v48 = vld [vmem:[%s1 + $0x68] sm:$0xff]
    %v49 = vld [vmem:[%s1 + $0x70] sm:$0xff]
    %v50 = vld [vmem:[%s1 + $0x78] sm:$0xff]
    %v51 = vld [vmem:[%s1 + $0x80] sm:$0xff]
    %v52 = vld [vmem:[%s1 + $0x88] sm:$0xff]
    %v53 = vld [vmem:[%s1 + $0x90] sm:$0xff]
    %v54 = vld [vmem:[%s1 + $0x98] sm:$0xff]
    %v55 = vld [vmem:[%s1 + $0xa0] sm:$0xff]
    %v56 = vld [vmem:[%s1 + $0xa8] sm:$0xff]
    %v57 = vld [vmem:[%s1 + $0xb0] sm:$0xff]
    %v58 = vld [vmem:[%s1 + $0xb8] sm:$0xff]
    %v59 = vld [vmem:[%s0] sm:$0xfe]
    %v60 = vld [vmem:[%s0 + $0x8] sm:$0xfe]
    %v61 = vld [vmem:[%s0 + $0x10] sm:$0x1]
    %v62 = vld [vmem:[%s0 + $0x18] sm:$0x1]
    %s63 = scalar_lea.vmem %s1, 192
    %v64 = vld [vmem:[%s63] sm:$0xff]
    %v65 = vld [vmem:[%s63 + $0x8] sm:$0xff]
    %v66 = vld [vmem:[%s63 + $0x10] sm:$0xff]
    %v67 = vld [vmem:[%s63 + $0x18] sm:$0xff]
    %v68 = vld [vmem:[%s63 + $0x20] sm:$0xff]
    %v69 = vld [vmem:[%s63 + $0x28] sm:$0xff]
    %v70 = vld [vmem:[%s63 + $0x30] sm:$0xff]
    %v71 = vld [vmem:[%s63 + $0x38] sm:$0xff]
    %v72 = vld [vmem:[%s63 + $0x40] sm:$0xff]
    %v73 = vld [vmem:[%s63 + $0x48] sm:$0xff]
    %v74 = vld [vmem:[%s63 + $0x50] sm:$0xff]
    %v75 = vld [vmem:[%s63 + $0x58] sm:$0xff]
    %v76 = vld [vmem:[%s63 + $0x60] sm:$0xff]
    %v77 = vld [vmem:[%s63 + $0x68] sm:$0xff]
    %v78 = vld [vmem:[%s63 + $0x70] sm:$0xff]
    %v79 = vld [vmem:[%s63 + $0x78] sm:$0xff]
    %v80 = vld [vmem:[%s63 + $0x80] sm:$0xff]
    %v81 = vld [vmem:[%s63 + $0x88] sm:$0xff]
    %v82 = vld [vmem:[%s63 + $0x90] sm:$0xff]
    %v83 = vld [vmem:[%s63 + $0x98] sm:$0xff]
    %v84 = vld [vmem:[%s63 + $0xa0] sm:$0xff]
    %v85 = vld [vmem:[%s63 + $0xa8] sm:$0xff]
    %v86 = vld [vmem:[%s63 + $0xb0] sm:$0xff]
    %v87 = vld [vmem:[%s63 + $0xb8] sm:$0xff]
    %vm92 = vcmask 1046528
    %v93 = vrot.slane %v59, 1
    %v94 = vrot.slane %v61, 1
    %v95 = vsel %vm92, %v93, %v94
    %v96 = vrot.slane %v60, 1
    %v97 = vrot.slane %v62, 1
    %v98 = vsel %vm92, %v96, %v97
    %vm100 = vcmask 523264
    %v101 = vsel %vm100, %v98, 0
    %103 = vmatprep.subr.mxu0 0.0
    %104 = vmatpush1.msra.mxu0 %v64
    %105 = vmatprep.subr.mxu0 0.0
    %106 = vmatpush1.msra.mxu0 %v65
    %107 = vmatprep.subr.mxu0 0.0
    %108 = vmatpush1.msra.mxu0 %v66
    %109 = vmatprep.subr.mxu0 0.0
    %110 = vmatpush1.msra.mxu0 %v67
    %111 = vmatprep.subr.mxu0 0.0
    %112 = vmatpush1.msra.mxu0 %v68
    %113 = vmatprep.subr.mxu0 0.0
    %114 = vmatpush1.msra.mxu0 %v69
    %115 = vmatprep.subr.mxu0 0.0
    %116 = vmatpush1.msra.mxu0 %v70
    %117 = vmatprep.subr.mxu0 0.0
    %118 = vmatpush1.msra.mxu0 %v71
    %119 = vmatprep.subr.mxu0 0.0
    %120 = vmatpush1.msra.mxu0 %v72
    %121 = vmatprep.subr.mxu0 0.0
    %122 = vmatpush1.msra.mxu0 %v73
    %123 = vmatprep.subr.mxu0 0.0
    %124 = vmatpush1.msra.mxu0 %v74
    %125 = vmatprep.subr.mxu0 0.0
    %126 = vmatpush1.msra.mxu0 %v75
    %127 = vmatprep.subr.mxu0 0.0
    %128 = vmatpush1.msra.mxu0 %v76
    %129 = vmatprep.subr.mxu0 0.0
    %130 = vmatpush1.msra.mxu0 %v77
    %131 = vmatprep.subr.mxu0 0.0
    %132 = vmatpush1.msra.mxu0 %v78
    %133 = vmatprep.subr.mxu0 0.0
    %134 = vmatpush1.msra.mxu0 %v79
    %135 = vmatprep.subr.mxu0 0.0
    %136 = vmatpush1.msra.mxu0 %v80
    %137 = vmatprep.subr.mxu0 0.0
    %138 = vmatpush1.msra.mxu0 %v81
    %139 = vmatprep.subr.mxu0 0.0
    %140 = vmatpush1.msra.mxu0 %v82
    %141 = vmatprep.subr.mxu0 0.0
    %142 = vmatpush1.msra.mxu0 %v83
    %143 = vmatprep.subr.mxu0 0.0
    %144 = vmatpush1.msra.mxu0 %v84
    %145 = vmatprep.subr.mxu0 0.0
    %146 = vmatpush1.msra.mxu0 %v85
    %147 = vmatprep.subr.mxu0 0.0
    %148 = vmatpush1.msra.mxu0 %v86
    %149 = vmatprep.subr.mxu0 0.0
    %150 = vmatpush1.msra.mxu0 %v87
    %151 = vmatprep.subr.mxu0 0.0
    %152 = vmatpush1.msra.mxu0 0.0
    %153 = vmatprep.subr.mxu0 0.0
    %154 = vmatpush1.msra.mxu0 0.0
    %155 = vmatprep.subr.mxu0 0.0
    %156 = vmatpush1.msra.mxu0 0.0
    %157 = vmatprep.subr.mxu0 0.0
    %158 = vmatpush1.msra.mxu0 0.0
    %159 = vmatprep.subr.mxu0 0.0
    %160 = vmatpush1.msra.mxu0 0.0
    %161 = vmatprep.subr.mxu0 0.0
    %162 = vmatpush1.msra.mxu0 0.0
    %163 = vmatprep.subr.mxu0 0.0
    %164 = vmatpush1.msra.mxu0 0.0
    %165 = vmatprep.subr.mxu0 0.0
    %166 = vmatpush1.msra.mxu0 0.0
    %167 = vmatprep.mubr.f32.mxu0 %v101
    %168 = vmatmul.mubr.f32.gmra.mrb[0].mxu0 %v95
    %v169 = vpop.f32.mrb[0].mxu0
    %v170 = vadd.f32 0.0, %v169
    %v171 = vpop.f32.mrb[0].mxu0
    %172 = vdwg.mxu0
    %v174 = vsel %vm100, %v34, 0
    %176 = vmatprep.subr.mxu0 0.0
    %177 = vmatpush1.msra.mxu0 %v35
    %178 = vmatprep.subr.mxu0 0.0
    %179 = vmatpush1.msra.mxu0 %v36
    %180 = vmatprep.subr.mxu0 0.0
    %181 = vmatpush1.msra.mxu0 %v37
    %182 = vmatprep.subr.mxu0 0.0
    %183 = vmatpush1.msra.mxu0 %v38
    %184 = vmatprep.subr.mxu0 0.0
    %185 = vmatpush1.msra.mxu0 %v39
    %186 = vmatprep.subr.mxu0 0.0
    %187 = vmatpush1.msra.mxu0 %v40
    %188 = vmatprep.subr.mxu0 0.0
    %189 = vmatpush1.msra.mxu0 %v41
    %190 = vmatprep.subr.mxu0 0.0
    %191 = vmatpush1.msra.mxu0 %v42
    %192 = vmatprep.subr.mxu0 0.0
    %193 = vmatpush1.msra.mxu0 %v43
    %194 = vmatprep.subr.mxu0 0.0
    %195 = vmatpush1.msra.mxu0 %v44
    %196 = vmatprep.subr.mxu0 0.0
    %197 = vmatpush1.msra.mxu0 %v45
    %198 = vmatprep.subr.mxu0 0.0
    %199 = vmatpush1.msra.mxu0 %v46
    %200 = vmatprep.subr.mxu0 0.0
    %201 = vmatpush1.msra.mxu0 %v47
    %202 = vmatprep.subr.mxu0 0.0
    %203 = vmatpush1.msra.mxu0 %v48
    %204 = vmatprep.subr.mxu0 0.0
    %205 = vmatpush1.msra.mxu0 %v49
    %206 = vmatprep.subr.mxu0 0.0
    %207 = vmatpush1.msra.mxu0 %v50
    %208 = vmatprep.subr.mxu0 0.0
    %209 = vmatpush1.msra.mxu0 %v51
    %210 = vmatprep.subr.mxu0 0.0
    %211 = vmatpush1.msra.mxu0 %v52
    %212 = vmatprep.subr.mxu0 0.0
    %213 = vmatpush1.msra.mxu0 %v53
    %214 = vmatprep.subr.mxu0 0.0
    %215 = vmatpush1.msra.mxu0 %v54
    %216 = vmatprep.subr.mxu0 0.0
    %217 = vmatpush1.msra.mxu0 %v55
    %218 = vmatprep.subr.mxu0 0.0
    %219 = vmatpush1.msra.mxu0 %v56
    %220 = vmatprep.subr.mxu0 0.0
    %221 = vmatpush1.msra.mxu0 %v57
    %222 = vmatprep.subr.mxu0 0.0
    %223 = vmatpush1.msra.mxu0 %v58
    %224 = vmatprep.subr.mxu0 0.0
    %225 = vmatpush1.msra.mxu0 0.0
    %226 = vmatprep.subr.mxu0 0.0
    %227 = vmatpush1.msra.mxu0 0.0
    %228 = vmatprep.subr.mxu0 0.0
    %229 = vmatpush1.msra.mxu0 0.0
    %230 = vmatprep.subr.mxu0 0.0
    %231 = vmatpush1.msra.mxu0 0.0
    %232 = vmatprep.subr.mxu0 0.0
    %233 = vmatpush1.msra.mxu0 0.0
    %234 = vmatprep.subr.mxu0 0.0
    %235 = vmatpush1.msra.mxu0 0.0
    %236 = vmatprep.subr.mxu0 0.0
    %237 = vmatpush1.msra.mxu0 0.0
    %238 = vmatprep.subr.mxu0 0.0
    %239 = vmatpush1.msra.mxu0 0.0
    %240 = vmatprep.mubr.f32.mxu0 %v174
    %241 = vmatmul.mubr.f32.gmra.mrb[0].mxu0 %v33
    %v242 = vpop.f32.mrb[0].mxu0
    %v243 = vadd.f32 %v170, %v242
    %v244 = vpop.f32.mrb[0].mxu0
    %245 = vdwg.mxu0
    %v246 = vld [vmem:[%s0] sm:$0xfc]
    %v247 = vld [vmem:[%s0 + $0x8] sm:$0xfc]
    %v248 = vld [vmem:[%s0 + $0x10] sm:$0x3]
    %v249 = vld [vmem:[%s0 + $0x18] sm:$0x3]
    %s250 = scalar_lea.vmem %s1, 384
    %v251 = vld [vmem:[%s250] sm:$0xff]
    %v252 = vld [vmem:[%s250 + $0x8] sm:$0xff]
    %v253 = vld [vmem:[%s250 + $0x10] sm:$0xff]
    %v254 = vld [vmem:[%s250 + $0x18] sm:$0xff]
    %v255 = vld [vmem:[%s250 + $0x20] sm:$0xff]
    %v256 = vld [vmem:[%s250 + $0x28] sm:$0xff]
    %v257 = vld [vmem:[%s250 + $0x30] sm:$0xff]
    %v258 = vld [vmem:[%s250 + $0x38] sm:$0xff]
    %v259 = vld [vmem:[%s250 + $0x40] sm:$0xff]
    %v260 = vld [vmem:[%s250 + $0x48] sm:$0xff]
    %v261 = vld [vmem:[%s250 + $0x50] sm:$0xff]
    %v262 = vld [vmem:[%s250 + $0x58] sm:$0xff]
    %v263 = vld [vmem:[%s250 + $0x60] sm:$0xff]
    %v264 = vld [vmem:[%s250 + $0x68] sm:$0xff]
    %v265 = vld [vmem:[%s250 + $0x70] sm:$0xff]
    %v266 = vld [vmem:[%s250 + $0x78] sm:$0xff]
    %v267 = vld [vmem:[%s250 + $0x80] sm:$0xff]
    %v268 = vld [vmem:[%s250 + $0x88] sm:$0xff]
    %v269 = vld [vmem:[%s250 + $0x90] sm:$0xff]
    %v270 = vld [vmem:[%s250 + $0x98] sm:$0xff]
    %v271 = vld [vmem:[%s250 + $0xa0] sm:$0xff]
    %v272 = vld [vmem:[%s250 + $0xa8] sm:$0xff]
    %v273 = vld [vmem:[%s250 + $0xb0] sm:$0xff]
    %v274 = vld [vmem:[%s250 + $0xb8] sm:$0xff]
    %vm279 = vcmask 1045504
    %v280 = vrot.slane %v246, 2
    %v281 = vrot.slane %v248, 2
    %v282 = vsel %vm279, %v280, %v281
    %v283 = vrot.slane %v247, 2
    %v284 = vrot.slane %v249, 2
    %v285 = vsel %vm279, %v283, %v284
    %v287 = vsel %vm100, %v285, 0
    %289 = vmatprep.subr.mxu0 0.0
    %290 = vmatpush1.msra.mxu0 %v251
    %291 = vmatprep.subr.mxu0 0.0
    %292 = vmatpush1.msra.mxu0 %v252
    %293 = vmatprep.subr.mxu0 0.0
    %294 = vmatpush1.msra.mxu0 %v253
    %295 = vmatprep.subr.mxu0 0.0
    %296 = vmatpush1.msra.mxu0 %v254
    %297 = vmatprep.subr.mxu0 0.0
    %298 = vmatpush1.msra.mxu0 %v255
    %299 = vmatprep.subr.mxu0 0.0
    %300 = vmatpush1.msra.mxu0 %v256
    %301 = vmatprep.subr.mxu0 0.0
    %302 = vmatpush1.msra.mxu0 %v257
    %303 = vmatprep.subr.mxu0 0.0
    %304 = vmatpush1.msra.mxu0 %v258
    %305 = vmatprep.subr.mxu0 0.0
    %306 = vmatpush1.msra.mxu0 %v259
    %307 = vmatprep.subr.mxu0 0.0
    %308 = vmatpush1.msra.mxu0 %v260
    %309 = vmatprep.subr.mxu0 0.0
    %310 = vmatpush1.msra.mxu0 %v261
    %311 = vmatprep.subr.mxu0 0.0
    %312 = vmatpush1.msra.mxu0 %v262
    %313 = vmatprep.subr.mxu0 0.0
    %314 = vmatpush1.msra.mxu0 %v263
    %315 = vmatprep.subr.mxu0 0.0
    %316 = vmatpush1.msra.mxu0 %v264
    %317 = vmatprep.subr.mxu0 0.0
    %318 = vmatpush1.msra.mxu0 %v265
    %319 = vmatprep.subr.mxu0 0.0
    %320 = vmatpush1.msra.mxu0 %v266
    %321 = vmatprep.subr.mxu0 0.0
    %322 = vmatpush1.msra.mxu0 %v267
    %323 = vmatprep.subr.mxu0 0.0
    %324 = vmatpush1.msra.mxu0 %v268
    %325 = vmatprep.subr.mxu0 0.0
    %326 = vmatpush1.msra.mxu0 %v269
    %327 = vmatprep.subr.mxu0 0.0
    %328 = vmatpush1.msra.mxu0 %v270
    %329 = vmatprep.subr.mxu0 0.0
    %330 = vmatpush1.msra.mxu0 %v271
    %331 = vmatprep.subr.mxu0 0.0
    %332 = vmatpush1.msra.mxu0 %v272
    %333 = vmatprep.subr.mxu0 0.0
    %334 = vmatpush1.msra.mxu0 %v273
    %335 = vmatprep.subr.mxu0 0.0
    %336 = vmatpush1.msra.mxu0 %v274
    %337 = vmatprep.subr.mxu0 0.0
    %338 = vmatpush1.msra.mxu0 0.0
    %339 = vmatprep.subr.mxu0 0.0
    %340 = vmatpush1.msra.mxu0 0.0
    %341 = vmatprep.subr.mxu0 0.0
    %342 = vmatpush1.msra.mxu0 0.0
    %343 = vmatprep.subr.mxu0 0.0
    %344 = vmatpush1.msra.mxu0 0.0
    %345 = vmatprep.subr.mxu0 0.0
    %346 = vmatpush1.msra.mxu0 0.0
    %347 = vmatprep.subr.mxu0 0.0
    %348 = vmatpush1.msra.mxu0 0.0
    %349 = vmatprep.subr.mxu0 0.0
    %350 = vmatpush1.msra.mxu0 0.0
    %351 = vmatprep.subr.mxu0 0.0
    %352 = vmatpush1.msra.mxu0 0.0
    %353 = vmatprep.mubr.f32.mxu0 %v287
    %354 = vmatmul.mubr.f32.gmra.mrb[0].mxu0 %v282
    %v355 = vpop.f32.mrb[0].mxu0
    %v356 = vadd.f32 0.0, %v355
    %v357 = vpop.f32.mrb[0].mxu0
    %358 = vdwg.mxu0
    %v359 = vadd.f32 %v243, %v356
    %v360 = vld [vmem:[%s0] sm:$0xf8]
    %v361 = vld [vmem:[%s0 + $0x8] sm:$0xf8]
    %v362 = vld [vmem:[%s0 + $0x10] sm:$0x7]
    %v363 = vld [vmem:[%s0 + $0x18] sm:$0x7]
    %s364 = scalar_lea.vmem %s1, 576
    %v365 = vld [vmem:[%s364] sm:$0xff]
    %v366 = vld [vmem:[%s364 + $0x8] sm:$0xff]
    %v367 = vld [vmem:[%s364 + $0x10] sm:$0xff]
    %v368 = vld [vmem:[%s364 + $0x18] sm:$0xff]
    %v369 = vld [vmem:[%s364 + $0x20] sm:$0xff]
    %v370 = vld [vmem:[%s364 + $0x28] sm:$0xff]
    %v371 = vld [vmem:[%s364 + $0x30] sm:$0xff]
    %v372 = vld [vmem:[%s364 + $0x38] sm:$0xff]
    %v373 = vld [vmem:[%s364 + $0x40] sm:$0xff]
    %v374 = vld [vmem:[%s364 + $0x48] sm:$0xff]
    %v375 = vld [vmem:[%s364 + $0x50] sm:$0xff]
    %v376 = vld [vmem:[%s364 + $0x58] sm:$0xff]
    %v377 = vld [vmem:[%s364 + $0x60] sm:$0xff]
    %v378 = vld [vmem:[%s364 + $0x68] sm:$0xff]
    %v379 = vld [vmem:[%s364 + $0x70] sm:$0xff]
    %v380 = vld [vmem:[%s364 + $0x78] sm:$0xff]
    %v381 = vld [vmem:[%s364 + $0x80] sm:$0xff]
    %v382 = vld [vmem:[%s364 + $0x88] sm:$0xff]
    %v383 = vld [vmem:[%s364 + $0x90] sm:$0xff]
    %v384 = vld [vmem:[%s364 + $0x98] sm:$0xff]
    %v385 = vld [vmem:[%s364 + $0xa0] sm:$0xff]
    %v386 = vld [vmem:[%s364 + $0xa8] sm:$0xff]
    %v387 = vld [vmem:[%s364 + $0xb0] sm:$0xff]
    %v388 = vld [vmem:[%s364 + $0xb8] sm:$0xff]
    %vm393 = vcmask 1044480
    %v394 = vrot.slane %v360, 3
    %v395 = vrot.slane %v362, 3
    %v396 = vsel %vm393, %v394, %v395
    %v397 = vrot.slane %v361, 3
    %v398 = vrot.slane %v363, 3
    %v399 = vsel %vm393, %v397, %v398
    %v401 = vsel %vm100, %v399, 0
    %403 = vmatprep.subr.mxu0 0.0
    %404 = vmatpush1.msra.mxu0 %v365
    %405 = vmatprep.subr.mxu0 0.0
    %406 = vmatpush1.msra.mxu0 %v366
    %407 = vmatprep.subr.mxu0 0.0
    %408 = vmatpush1.msra.mxu0 %v367
    %409 = vmatprep.subr.mxu0 0.0
    %410 = vmatpush1.msra.mxu0 %v368
    %411 = vmatprep.subr.mxu0 0.0
    %412 = vmatpush1.msra.mxu0 %v369
    %413 = vmatprep.subr.mxu0 0.0
    %414 = vmatpush1.msra.mxu0 %v370
    %415 = vmatprep.subr.mxu0 0.0
    %416 = vmatpush1.msra.mxu0 %v371
    %417 = vmatprep.subr.mxu0 0.0
    %418 = vmatpush1.msra.mxu0 %v372
    %419 = vmatprep.subr.mxu0 0.0
    %420 = vmatpush1.msra.mxu0 %v373
    %421 = vmatprep.subr.mxu0 0.0
    %422 = vmatpush1.msra.mxu0 %v374
    %423 = vmatprep.subr.mxu0 0.0
    %424 = vmatpush1.msra.mxu0 %v375
    %425 = vmatprep.subr.mxu0 0.0
    %426 = vmatpush1.msra.mxu0 %v376
    %427 = vmatprep.subr.mxu0 0.0
    %428 = vmatpush1.msra.mxu0 %v377
    %429 = vmatprep.subr.mxu0 0.0
    %430 = vmatpush1.msra.mxu0 %v378
    %431 = vmatprep.subr.mxu0 0.0
    %432 = vmatpush1.msra.mxu0 %v379
    %433 = vmatprep.subr.mxu0 0.0
    %434 = vmatpush1.msra.mxu0 %v380
    %435 = vmatprep.subr.mxu0 0.0
    %436 = vmatpush1.msra.mxu0 %v381
    %437 = vmatprep.subr.mxu0 0.0
    %438 = vmatpush1.msra.mxu0 %v382
    %439 = vmatprep.subr.mxu0 0.0
    %440 = vmatpush1.msra.mxu0 %v383
    %441 = vmatprep.subr.mxu0 0.0
    %442 = vmatpush1.msra.mxu0 %v384
    %443 = vmatprep.subr.mxu0 0.0
    %444 = vmatpush1.msra.mxu0 %v385
    %445 = vmatprep.subr.mxu0 0.0
    %446 = vmatpush1.msra.mxu0 %v386
    %447 = vmatprep.subr.mxu0 0.0
    %448 = vmatpush1.msra.mxu0 %v387
    %449 = vmatprep.subr.mxu0 0.0
    %450 = vmatpush1.msra.mxu0 %v388
    %451 = vmatprep.subr.mxu0 0.0
    %452 = vmatpush1.msra.mxu0 0.0
    %453 = vmatprep.subr.mxu0 0.0
    %454 = vmatpush1.msra.mxu0 0.0
    %455 = vmatprep.subr.mxu0 0.0
    %456 = vmatpush1.msra.mxu0 0.0
    %457 = vmatprep.subr.mxu0 0.0
    %458 = vmatpush1.msra.mxu0 0.0
    %459 = vmatprep.subr.mxu0 0.0
    %460 = vmatpush1.msra.mxu0 0.0
    %461 = vmatprep.subr.mxu0 0.0
    %462 = vmatpush1.msra.mxu0 0.0
    %463 = vmatprep.subr.mxu0 0.0
    %464 = vmatpush1.msra.mxu0 0.0
    %465 = vmatprep.subr.mxu0 0.0
    %466 = vmatpush1.msra.mxu0 0.0
    %467 = vmatprep.mubr.f32.mxu0 %v401
    %468 = vmatmul.mubr.f32.gmra.mrb[0].mxu0 %v396
    %v469 = vpop.f32.mrb[0].mxu0
    %v470 = vadd.f32 0.0, %v469
    %v471 = vpop.f32.mrb[0].mxu0
    %472 = vdwg.mxu0
    %v473 = vadd.f32 %v359, %v470
    %vm474 = vcmask 130048
    %475 = vst.msk [vmem:[#allocation2] sm:$0xff] %vm474, %v473
    %v476 = vld [vmem:[%s0 + $0x10] sm:$0xf8]
    %v477 = vld [vmem:[%s0 + $0x18] sm:$0xf8]
    %v478 = vld [vmem:[%s0 + $0x20] sm:$0x7]
    %v479 = vld [vmem:[%s0 + $0x28] sm:$0x7]
    %v480 = vld [vmem:[%s1] sm:$0xff]
    %v481 = vld [vmem:[%s1 + $0x8] sm:$0xff]
    %v482 = vld [vmem:[%s1 + $0x10] sm:$0xff]
    %v483 = vld [vmem:[%s1 + $0x18] sm:$0xff]
    %v484 = vld [vmem:[%s1 + $0x20] sm:$0xff]
    %v485 = vld [vmem:[%s1 + $0x28] sm:$0xff]
    %v486 = vld [vmem:[%s1 + $0x30] sm:$0xff]
    %v487 = vld [vmem:[%s1 + $0x38] sm:$0xff]
    %v488 = vld [vmem:[%s1 + $0x40] sm:$0xff]
    %v489 = vld [vmem:[%s1 + $0x48] sm:$0xff]
    %v490 = vld [vmem:[%s1 + $0x50] sm:$0xff]
    %v491 = vld [vmem:[%s1 + $0x58] sm:$0xff]
    %v492 = vld [vmem:[%s1 + $0x60] sm:$0xff]
    %v493 = vld [vmem:[%s1 + $0x68] sm:$0xff]
    %v494 = vld [vmem:[%s1 + $0x70] sm:$0xff]
    %v495 = vld [vmem:[%s1 + $0x78] sm:$0xff]
    %v496 = vld [vmem:[%s1 + $0x80] sm:$0xff]
    %v497 = vld [vmem:[%s1 + $0x88] sm:$0xff]
    %v498 = vld [vmem:[%s1 + $0x90] sm:$0xff]
    %v499 = vld [vmem:[%s1 + $0x98] sm:$0xff]
    %v500 = vld [vmem:[%s1 + $0xa0] sm:$0xff]
    %v501 = vld [vmem:[%s1 + $0xa8] sm:$0xff]
    %v502 = vld [vmem:[%s1 + $0xb0] sm:$0xff]
    %v503 = vld [vmem:[%s1 + $0xb8] sm:$0xff]
    %v504 = vld [vmem:[%s0 + $0x10] sm:$0xf0]
    %v505 = vld [vmem:[%s0 + $0x18] sm:$0xf0]
    %v506 = vld [vmem:[%s0 + $0x20] sm:$0xf]
    %v507 = vld [vmem:[%s0 + $0x28] sm:$0xf]
    %v508 = vld [vmem:[%s63] sm:$0xff]
    %v509 = vld [vmem:[%s63 + $0x8] sm:$0xff]
    %v510 = vld [vmem:[%s63 + $0x10] sm:$0xff]
    %v511 = vld [vmem:[%s63 + $0x18] sm:$0xff]
    %v512 = vld [vmem:[%s63 + $0x20] sm:$0xff]
    %v513 = vld [vmem:[%s63 + $0x28] sm:$0xff]
    %v514 = vld [vmem:[%s63 + $0x30] sm:$0xff]
    %v515 = vld [vmem:[%s63 + $0x38] sm:$0xff]
    %v516 = vld [vmem:[%s63 + $0x40] sm:$0xff]
    %v517 = vld [vmem:[%s63 + $0x48] sm:$0xff]
    %v518 = vld [vmem:[%s63 + $0x50] sm:$0xff]
    %v519 = vld [vmem:[%s63 + $0x58] sm:$0xff]
    %v520 = vld [vmem:[%s63 + $0x60] sm:$0xff]
    %v521 = vld [vmem:[%s63 + $0x68] sm:$0xff]
    %v522 = vld [vmem:[%s63 + $0x70] sm:$0xff]
    %v523 = vld [vmem:[%s63 + $0x78] sm:$0xff]
    %v524 = vld [vmem:[%s63 + $0x80] sm:$0xff]
    %v525 = vld [vmem:[%s63 + $0x88] sm:$0xff]
    %v526 = vld [vmem:[%s63 + $0x90] sm:$0xff]
    %v527 = vld [vmem:[%s63 + $0x98] sm:$0xff]
    %v528 = vld [vmem:[%s63 + $0xa0] sm:$0xff]
    %v529 = vld [vmem:[%s63 + $0xa8] sm:$0xff]
    %v530 = vld [vmem:[%s63 + $0xb0] sm:$0xff]
    %v531 = vld [vmem:[%s63 + $0xb8] sm:$0xff]
    %vm536 = vcmask 1043456
    %v537 = vrot.slane %v504, 4
    %v538 = vrot.slane %v506, 4
    %v539 = vsel %vm536, %v537, %v538
    %v540 = vrot.slane %v505, 4
    %v541 = vrot.slane %v507, 4
    %v542 = vsel %vm536, %v540, %v541
    %v544 = vsel %vm100, %v542, 0
    %546 = vmatprep.subr.mxu0 0.0
    %547 = vmatpush1.msra.mxu0 %v508
    %548 = vmatprep.subr.mxu0 0.0
    %549 = vmatpush1.msra.mxu0 %v509
    %550 = vmatprep.subr.mxu0 0.0
    %551 = vmatpush1.msra.mxu0 %v510
    %552 = vmatprep.subr.mxu0 0.0
    %553 = vmatpush1.msra.mxu0 %v511
    %554 = vmatprep.subr.mxu0 0.0
    %555 = vmatpush1.msra.mxu0 %v512
    %556 = vmatprep.subr.mxu0 0.0
    %557 = vmatpush1.msra.mxu0 %v513
    %558 = vmatprep.subr.mxu0 0.0
    %559 = vmatpush1.msra.mxu0 %v514
    %560 = vmatprep.subr.mxu0 0.0
    %561 = vmatpush1.msra.mxu0 %v515
    %562 = vmatprep.subr.mxu0 0.0
    %563 = vmatpush1.msra.mxu0 %v516
    %564 = vmatprep.subr.mxu0 0.0
    %565 = vmatpush1.msra.mxu0 %v517
    %566 = vmatprep.subr.mxu0 0.0
    %567 = vmatpush1.msra.mxu0 %v518
    %568 = vmatprep.subr.mxu0 0.0
    %569 = vmatpush1.msra.mxu0 %v519
    %570 = vmatprep.subr.mxu0 0.0
    %571 = vmatpush1.msra.mxu0 %v520
    %572 = vmatprep.subr.mxu0 0.0
    %573 = vmatpush1.msra.mxu0 %v521
    %574 = vmatprep.subr.mxu0 0.0
    %575 = vmatpush1.msra.mxu0 %v522
    %576 = vmatprep.subr.mxu0 0.0
    %577 = vmatpush1.msra.mxu0 %v523
    %578 = vmatprep.subr.mxu0 0.0
    %579 = vmatpush1.msra.mxu0 %v524
    %580 = vmatprep.subr.mxu0 0.0
    %581 = vmatpush1.msra.mxu0 %v525
    %582 = vmatprep.subr.mxu0 0.0
    %583 = vmatpush1.msra.mxu0 %v526
    %584 = vmatprep.subr.mxu0 0.0
    %585 = vmatpush1.msra.mxu0 %v527
    %586 = vmatprep.subr.mxu0 0.0
    %587 = vmatpush1.msra.mxu0 %v528
    %588 = vmatprep.subr.mxu0 0.0
    %589 = vmatpush1.msra.mxu0 %v529
    %590 = vmatprep.subr.mxu0 0.0
    %591 = vmatpush1.msra.mxu0 %v530
    %592 = vmatprep.subr.mxu0 0.0
    %593 = vmatpush1.msra.mxu0 %v531
    %594 = vmatprep.subr.mxu0 0.0
    %595 = vmatpush1.msra.mxu0 0.0
    %596 = vmatprep.subr.mxu0 0.0
    %597 = vmatpush1.msra.mxu0 0.0
    %598 = vmatprep.subr.mxu0 0.0
    %599 = vmatpush1.msra.mxu0 0.0
    %600 = vmatprep.subr.mxu0 0.0
    %601 = vmatpush1.msra.mxu0 0.0
    %602 = vmatprep.subr.mxu0 0.0
    %603 = vmatpush1.msra.mxu0 0.0
    %604 = vmatprep.subr.mxu0 0.0
    %605 = vmatpush1.msra.mxu0 0.0
    %606 = vmatprep.subr.mxu0 0.0
    %607 = vmatpush1.msra.mxu0 0.0
    %608 = vmatprep.subr.mxu0 0.0
    %609 = vmatpush1.msra.mxu0 0.0
    %610 = vmatprep.mubr.f32.mxu0 %v544
    %611 = vmatmul.mubr.f32.gmra.mrb[0].mxu0 %v539
    %v612 = vpop.f32.mrb[0].mxu0
    %v613 = vadd.f32 0.0, %v612
    %v614 = vpop.f32.mrb[0].mxu0
    %615 = vdwg.mxu0
    %v620 = vrot.slane %v476, 3
    %v621 = vrot.slane %v478, 3
    %v622 = vsel %vm393, %v620, %v621
    %v623 = vrot.slane %v477, 3
    %v624 = vrot.slane %v479, 3
    %v625 = vsel %vm393, %v623, %v624
    %v627 = vsel %vm100, %v625, 0
    %629 = vmatprep.subr.mxu0 0.0
    %630 = vmatpush1.msra.mxu0 %v480
    %631 = vmatprep.subr.mxu0 0.0
    %632 = vmatpush1.msra.mxu0 %v481
    %633 = vmatprep.subr.mxu0 0.0
    %634 = vmatpush1.msra.mxu0 %v482
    %635 = vmatprep.subr.mxu0 0.0
    %636 = vmatpush1.msra.mxu0 %v483
    %637 = vmatprep.subr.mxu0 0.0
    %638 = vmatpush1.msra.mxu0 %v484
    %639 = vmatprep.subr.mxu0 0.0
    %640 = vmatpush1.msra.mxu0 %v485
    %641 = vmatprep.subr.mxu0 0.0
    %642 = vmatpush1.msra.mxu0 %v486
    %643 = vmatprep.subr.mxu0 0.0
    %644 = vmatpush1.msra.mxu0 %v487
    %645 = vmatprep.subr.mxu0 0.0
    %646 = vmatpush1.msra.mxu0 %v488
    %647 = vmatprep.subr.mxu0 0.0
    %648 = vmatpush1.msra.mxu0 %v489
    %649 = vmatprep.subr.mxu0 0.0
    %650 = vmatpush1.msra.mxu0 %v490
    %651 = vmatprep.subr.mxu0 0.0
    %652 = vmatpush1.msra.mxu0 %v491
    %653 = vmatprep.subr.mxu0 0.0
    %654 = vmatpush1.msra.mxu0 %v492
    %655 = vmatprep.subr.mxu0 0.0
    %656 = vmatpush1.msra.mxu0 %v493
    %657 = vmatprep.subr.mxu0 0.0
    %658 = vmatpush1.msra.mxu0 %v494
    %659 = vmatprep.subr.mxu0 0.0
    %660 = vmatpush1.msra.mxu0 %v495
    %661 = vmatprep.subr.mxu0 0.0
    %662 = vmatpush1.msra.mxu0 %v496
    %663 = vmatprep.subr.mxu0 0.0
    %664 = vmatpush1.msra.mxu0 %v497
    %665 = vmatprep.subr.mxu0 0.0
    %666 = vmatpush1.msra.mxu0 %v498
    %667 = vmatprep.subr.mxu0 0.0
    %668 = vmatpush1.msra.mxu0 %v499
    %669 = vmatprep.subr.mxu0 0.0
    %670 = vmatpush1.msra.mxu0 %v500
    %671 = vmatprep.subr.mxu0 0.0
    %672 = vmatpush1.msra.mxu0 %v501
    %673 = vmatprep.subr.mxu0 0.0
    %674 = vmatpush1.msra.mxu0 %v502
    %675 = vmatprep.subr.mxu0 0.0
    %676 = vmatpush1.msra.mxu0 %v503
    %677 = vmatprep.subr.mxu0 0.0
    %678 = vmatpush1.msra.mxu0 0.0
    %679 = vmatprep.subr.mxu0 0.0
    %680 = vmatpush1.msra.mxu0 0.0
    %681 = vmatprep.subr.mxu0 0.0
    %682 = vmatpush1.msra.mxu0 0.0
    %683 = vmatprep.subr.mxu0 0.0
    %684 = vmatpush1.msra.mxu0 0.0
    %685 = vmatprep.subr.mxu0 0.0
    %686 = vmatpush1.msra.mxu0 0.0
    %687 = vmatprep.subr.mxu0 0.0
    %688 = vmatpush1.msra.mxu0 0.0
    %689 = vmatprep.subr.mxu0 0.0
    %690 = vmatpush1.msra.mxu0 0.0
    %691 = vmatprep.subr.mxu0 0.0
    %692 = vmatpush1.msra.mxu0 0.0
    %693 = vmatprep.mubr.f32.mxu0 %v627
    %694 = vmatmul.mubr.f32.gmra.mrb[0].mxu0 %v622
    %v695 = vpop.f32.mrb[0].mxu0
    %v696 = vadd.f32 %v613, %v695
    %v697 = vpop.f32.mrb[0].mxu0
    %698 = vdwg.mxu0
    %v699 = vld [vmem:[%s0 + $0x10] sm:$0xe0]
    %v700 = vld [vmem:[%s0 + $0x18] sm:$0xe0]
    %v701 = vld [vmem:[%s0 + $0x20] sm:$0x1f]
    %v702 = vld [vmem:[%s0 + $0x28] sm:$0x1f]
    %v703 = vld [vmem:[%s250] sm:$0xff]
    %v704 = vld [vmem:[%s250 + $0x8] sm:$0xff]
    %v705 = vld [vmem:[%s250 + $0x10] sm:$0xff]
    %v706 = vld [vmem:[%s250 + $0x18] sm:$0xff]
    %v707 = vld [vmem:[%s250 + $0x20] sm:$0xff]
    %v708 = vld [vmem:[%s250 + $0x28] sm:$0xff]
    %v709 = vld [vmem:[%s250 + $0x30] sm:$0xff]
    %v710 = vld [vmem:[%s250 + $0x38] sm:$0xff]
    %v711 = vld [vmem:[%s250 + $0x40] sm:$0xff]
    %v712 = vld [vmem:[%s250 + $0x48] sm:$0xff]
    %v713 = vld [vmem:[%s250 + $0x50] sm:$0xff]
    %v714 = vld [vmem:[%s250 + $0x58] sm:$0xff]
    %v715 = vld [vmem:[%s250 + $0x60] sm:$0xff]
    %v716 = vld [vmem:[%s250 + $0x68] sm:$0xff]
    %v717 = vld [vmem:[%s250 + $0x70] sm:$0xff]
    %v718 = vld [vmem:[%s250 + $0x78] sm:$0xff]
    %v719 = vld [vmem:[%s250 + $0x80] sm:$0xff]
    %v720 = vld [vmem:[%s250 + $0x88] sm:$0xff]
    %v721 = vld [vmem:[%s250 + $0x90] sm:$0xff]
    %v722 = vld [vmem:[%s250 + $0x98] sm:$0xff]
    %v723 = vld [vmem:[%s250 + $0xa0] sm:$0xff]
    %v724 = vld [vmem:[%s250 + $0xa8] sm:$0xff]
    %v725 = vld [vmem:[%s250 + $0xb0] sm:$0xff]
    %v726 = vld [vmem:[%s250 + $0xb8] sm:$0xff]
    %vm731 = vcmask 1042432
    %v732 = vrot.slane %v699, 5
    %v733 = vrot.slane %v701, 5
    %v734 = vsel %vm731, %v732, %v733
    %v735 = vrot.slane %v700, 5
    %v736 = vrot.slane %v702, 5
    %v737 = vsel %vm731, %v735, %v736
    %v739 = vsel %vm100, %v737, 0
    %741 = vmatprep.subr.mxu0 0.0
    %742 = vmatpush1.msra.mxu0 %v703
    %743 = vmatprep.subr.mxu0 0.0
    %744 = vmatpush1.msra.mxu0 %v704
    %745 = vmatprep.subr.mxu0 0.0
    %746 = vmatpush1.msra.mxu0 %v705
    %747 = vmatprep.subr.mxu0 0.0
    %748 = vmatpush1.msra.mxu0 %v706
    %749 = vmatprep.subr.mxu0 0.0
    %750 = vmatpush1.msra.mxu0 %v707
    %751 = vmatprep.subr.mxu0 0.0
    %752 = vmatpush1.msra.mxu0 %v708
    %753 = vmatprep.subr.mxu0 0.0
    %754 = vmatpush1.msra.mxu0 %v709
    %755 = vmatprep.subr.mxu0 0.0
    %756 = vmatpush1.msra.mxu0 %v710
    %757 = vmatprep.subr.mxu0 0.0
    %758 = vmatpush1.msra.mxu0 %v711
    %759 = vmatprep.subr.mxu0 0.0
    %760 = vmatpush1.msra.mxu0 %v712
    %761 = vmatprep.subr.mxu0 0.0
    %762 = vmatpush1.msra.mxu0 %v713
    %763 = vmatprep.subr.mxu0 0.0
    %764 = vmatpush1.msra.mxu0 %v714
    %765 = vmatprep.subr.mxu0 0.0
    %766 = vmatpush1.msra.mxu0 %v715
    %767 = vmatprep.subr.mxu0 0.0
    %768 = vmatpush1.msra.mxu0 %v716
    %769 = vmatprep.subr.mxu0 0.0
    %770 = vmatpush1.msra.mxu0 %v717
    %771 = vmatprep.subr.mxu0 0.0
    %772 = vmatpush1.msra.mxu0 %v718
    %773 = vmatprep.subr.mxu0 0.0
    %774 = vmatpush1.msra.mxu0 %v719
    %775 = vmatprep.subr.mxu0 0.0
    %776 = vmatpush1.msra.mxu0 %v720
    %777 = vmatprep.subr.mxu0 0.0
    %778 = vmatpush1.msra.mxu0 %v721
    %779 = vmatprep.subr.mxu0 0.0
    %780 = vmatpush1.msra.mxu0 %v722
    %781 = vmatprep.subr.mxu0 0.0
    %782 = vmatpush1.msra.mxu0 %v723
    %783 = vmatprep.subr.mxu0 0.0
    %784 = vmatpush1.msra.mxu0 %v724
    %785 = vmatprep.subr.mxu0 0.0
    %786 = vmatpush1.msra.mxu0 %v725
    %787 = vmatprep.subr.mxu0 0.0
    %788 = vmatpush1.msra.mxu0 %v726
    %789 = vmatprep.subr.mxu0 0.0
    %790 = vmatpush1.msra.mxu0 0.0
    %791 = vmatprep.subr.mxu0 0.0
    %792 = vmatpush1.msra.mxu0 0.0
    %793 = vmatprep.subr.mxu0 0.0
    %794 = vmatpush1.msra.mxu0 0.0
    %795 = vmatprep.subr.mxu0 0.0
    %796 = vmatpush1.msra.mxu0 0.0
    %797 = vmatprep.subr.mxu0 0.0
    %798 = vmatpush1.msra.mxu0 0.0
    %799 = vmatprep.subr.mxu0 0.0
    %800 = vmatpush1.msra.mxu0 0.0
    %801 = vmatprep.subr.mxu0 0.0
    %802 = vmatpush1.msra.mxu0 0.0
    %803 = vmatprep.subr.mxu0 0.0
    %804 = vmatpush1.msra.mxu0 0.0
    %805 = vmatprep.mubr.f32.mxu0 %v739
    %806 = vmatmul.mubr.f32.gmra.mrb[0].mxu0 %v734
    %v807 = vpop.f32.mrb[0].mxu0
    %v808 = vadd.f32 0.0, %v807
    %v809 = vpop.f32.mrb[0].mxu0
    %810 = vdwg.mxu0
    %v811 = vadd.f32 %v696, %v808
    %v812 = vld [vmem:[%s0 + $0x10] sm:$0xc0]
    %v813 = vld [vmem:[%s0 + $0x18] sm:$0xc0]
    %v814 = vld [vmem:[%s0 + $0x20] sm:$0x3f]
    %v815 = vld [vmem:[%s0 + $0x28] sm:$0x3f]
    %v816 = vld [vmem:[%s364] sm:$0xff]
    %v817 = vld [vmem:[%s364 + $0x8] sm:$0xff]
    %v818 = vld [vmem:[%s364 + $0x10] sm:$0xff]
    %v819 = vld [vmem:[%s364 + $0x18] sm:$0xff]
    %v820 = vld [vmem:[%s364 + $0x20] sm:$0xff]
    %v821 = vld [vmem:[%s364 + $0x28] sm:$0xff]
    %v822 = vld [vmem:[%s364 + $0x30] sm:$0xff]
    %v823 = vld [vmem:[%s364 + $0x38] sm:$0xff]
    %v824 = vld [vmem:[%s364 + $0x40] sm:$0xff]
    %v825 = vld [vmem:[%s364 + $0x48] sm:$0xff]
    %v826 = vld [vmem:[%s364 + $0x50] sm:$0xff]
    %v827 = vld [vmem:[%s364 + $0x58] sm:$0xff]
    %v828 = vld [vmem:[%s364 + $0x60] sm:$0xff]
    %v829 = vld [vmem:[%s364 + $0x68] sm:$0xff]
    %v830 = vld [vmem:[%s364 + $0x70] sm:$0xff]
    %v831 = vld [vmem:[%s364 + $0x78] sm:$0xff]
    %v832 = vld [vmem:[%s364 + $0x80] sm:$0xff]
    %v833 = vld [vmem:[%s364 + $0x88] sm:$0xff]
    %v834 = vld [vmem:[%s364 + $0x90] sm:$0xff]
    %v835 = vld [vmem:[%s364 + $0x98] sm:$0xff]
    %v836 = vld [vmem:[%s364 + $0xa0] sm:$0xff]
    %v837 = vld [vmem:[%s364 + $0xa8] sm:$0xff]
    %v838 = vld [vmem:[%s364 + $0xb0] sm:$0xff]
    %v839 = vld [vmem:[%s364 + $0xb8] sm:$0xff]
    %vm844 = vcmask 1041408
    %v845 = vrot.slane %v812, 6
    %v846 = vrot.slane %v814, 6
    %v847 = vsel %vm844, %v845, %v846
    %v848 = vrot.slane %v813, 6
    %v849 = vrot.slane %v815, 6
    %v850 = vsel %vm844, %v848, %v849
    %v852 = vsel %vm100, %v850, 0
    %854 = vmatprep.subr.mxu0 0.0
    %855 = vmatpush1.msra.mxu0 %v816
    %856 = vmatprep.subr.mxu0 0.0
    %857 = vmatpush1.msra.mxu0 %v817
    %858 = vmatprep.subr.mxu0 0.0
    %859 = vmatpush1.msra.mxu0 %v818
    %860 = vmatprep.subr.mxu0 0.0
    %861 = vmatpush1.msra.mxu0 %v819
    %862 = vmatprep.subr.mxu0 0.0
    %863 = vmatpush1.msra.mxu0 %v820
    %864 = vmatprep.subr.mxu0 0.0
    %865 = vmatpush1.msra.mxu0 %v821
    %866 = vmatprep.subr.mxu0 0.0
    %867 = vmatpush1.msra.mxu0 %v822
    %868 = vmatprep.subr.mxu0 0.0
    %869 = vmatpush1.msra.mxu0 %v823
    %870 = vmatprep.subr.mxu0 0.0
    %871 = vmatpush1.msra.mxu0 %v824
    %872 = vmatprep.subr.mxu0 0.0
    %873 = vmatpush1.msra.mxu0 %v825
    %874 = vmatprep.subr.mxu0 0.0
    %875 = vmatpush1.msra.mxu0 %v826
    %876 = vmatprep.subr.mxu0 0.0
    %877 = vmatpush1.msra.mxu0 %v827
    %878 = vmatprep.subr.mxu0 0.0
    %879 = vmatpush1.msra.mxu0 %v828
    %880 = vmatprep.subr.mxu0 0.0
    %881 = vmatpush1.msra.mxu0 %v829
    %882 = vmatprep.subr.mxu0 0.0
    %883 = vmatpush1.msra.mxu0 %v830
    %884 = vmatprep.subr.mxu0 0.0
    %885 = vmatpush1.msra.mxu0 %v831
    %886 = vmatprep.subr.mxu0 0.0
    %887 = vmatpush1.msra.mxu0 %v832
    %888 = vmatprep.subr.mxu0 0.0
    %889 = vmatpush1.msra.mxu0 %v833
    %890 = vmatprep.subr.mxu0 0.0
    %891 = vmatpush1.msra.mxu0 %v834
    %892 = vmatprep.subr.mxu0 0.0
    %893 = vmatpush1.msra.mxu0 %v835
    %894 = vmatprep.subr.mxu0 0.0
    %895 = vmatpush1.msra.mxu0 %v836
    %896 = vmatprep.subr.mxu0 0.0
    %897 = vmatpush1.msra.mxu0 %v837
    %898 = vmatprep.subr.mxu0 0.0
    %899 = vmatpush1.msra.mxu0 %v838
    %900 = vmatprep.subr.mxu0 0.0
    %901 = vmatpush1.msra.mxu0 %v839
    %902 = vmatprep.subr.mxu0 0.0
    %903 = vmatpush1.msra.mxu0 0.0
    %904 = vmatprep.subr.mxu0 0.0
    %905 = vmatpush1.msra.mxu0 0.0
    %906 = vmatprep.subr.mxu0 0.0
    %907 = vmatpush1.msra.mxu0 0.0
    %908 = vmatprep.subr.mxu0 0.0
    %909 = vmatpush1.msra.mxu0 0.0
    %910 = vmatprep.subr.mxu0 0.0
    %911 = vmatpush1.msra.mxu0 0.0
    %912 = vmatprep.subr.mxu0 0.0
    %913 = vmatpush1.msra.mxu0 0.0
    %914 = vmatprep.subr.mxu0 0.0
    %915 = vmatpush1.msra.mxu0 0.0
    %916 = vmatprep.subr.mxu0 0.0
    %917 = vmatpush1.msra.mxu0 0.0
    %918 = vmatprep.mubr.f32.mxu0 %v852
    %919 = vmatmul.mubr.f32.gmra.mrb[0].mxu0 %v847
    %v920 = vpop.f32.mrb[0].mxu0
    %v921 = vadd.f32 0.0, %v920
    %v922 = vpop.f32.mrb[0].mxu0
    %923 = vdwg.mxu0
    %v924 = vadd.f32 %v811, %v921
    %925 = vst.msk [vmem:[#allocation2 + $0x8] sm:$0xff] %vm474, %v924
    %v926 = vld [vmem:[#allocation2] sm:$0xff]
    %v927 = vld [vmem:[#allocation2 + $0x8] sm:$0xff]
    %v928 = vld [vmem:[%s6] sm:$0x1]
    %v929 = vld [vmem:[%s6 + $0x1] sm:$0x1]
    %v930 = vsel %vm474, %v926, 0.0
    %v931 = vsel %vm474, %v927, 0.0
    %v932 = vadd.f32 %v930, %v931
    %v933 = vrot.slane %v932, 4
    %v934 = vadd.f32 %v932, %v933
    %v935 = vrot.slane %v934, 2
    %v936 = vadd.f32 %v934, %v935
    %v937 = vrot.slane %v936, 1
    %v938 = vadd.f32 %v936, %v937
    %v939 = vrcp.pop 16.0
    %v940 = vmul.f32 %v938, %v939
    %v941 = vsub.f32 %v926, %v940
    %v942 = vsub.f32 %v927, %v940
    %v943 = vmul.f32 %v941, %v941
    %v944 = vmul.f32 %v942, %v942
    %v945 = vsel %vm474, %v943, 0.0
    %v946 = vsel %vm474, %v944, 0.0
    %v947 = vadd.f32 %v945, %v946
    %v948 = vrot.slane %v947, 4
    %v949 = vadd.f32 %v947, %v948
    %v950 = vrot.slane %v949, 2
    %v951 = vadd.f32 %v949, %v950
    %v952 = vrot.slane %v951, 1
    %v953 = vadd.f32 %v951, %v952
    %v954 = vmul.f32 %v953, %v939
    %v955 = vadd.f32 %v954, 1e-05
    %v956 = vrsqrt.pop %v955
    %v957 = vmul.f32 %v941, %v956
    %v958 = vmul.f32 %v942, %v956
    %v959 = vlaneseq
    %v960 = vshrl.u32 %v959, 7
    %v961 = vsub.s32 0, %v960
    %v962 = vrot.slane %v928, %v961
    %v963 = vmul.f32 %v957, %v962
    %v964 = vmul.f32 %v958, %v962
    %v965 = vlaneseq
    %v966 = vshrl.u32 %v965, 7
    %v967 = vsub.s32 0, %v966
    %v968 = vrot.slane %v929, %v967
    %v969 = vadd.f32 %v963, %v968
    %v970 = vadd.f32 %v964, %v968
    %v971 = vmax.f32 %v969, 0.0
    %v972 = vmax.f32 %v970, 0.0
    %973 = vst.msk [vmem:[#allocation2] sm:$0xff] %vm474, %v971
    %974 = vst.msk [vmem:[#allocation2 + $0x8] sm:$0xff] %vm474, %v972
    %v975 = vld [vmem:[#allocation2] ss:$2 sm:$0xff]
    %s976 = scalar_lea.vmem [#allocation2], 1
    %v977 = vld [vmem:[%s976] ss:$2 sm:$0xff]
    %v978 = vmax.f32 %v975, %v977
    %979 = vst.msk [vmem:[#allocation2 + $0x1] sm:$0xff] %vm474, %v978
    %vm980 = vcmask 122880
    %981 = vst.msk [vmem:[#allocation2] sm:$0x1] %vm980, 0.0
    %982 = vst.msk [vmem:[#allocation2 + $0x9] sm:$0x1] %vm980, 0.0
    %v983 = vld [vmem:[#allocation2] sm:$0xff]
    %v984 = vld [vmem:[#allocation2 + $0x1] sm:$0xff]
    %v985 = vld [vmem:[#allocation2 + $0x2] sm:$0xff]
    %v986 = vlaneseq
    %v987 = vshrl.u32 %v986, 7
    %v988 = vand.u32 %v987, 3
    %vm989 = vcmp.eq.s32.totalorder %v988, 0
    %v990 = vsel %vm989, 1, 0
    %vm991 = vcmp.eq.s32.totalorder %v990, 1
    %v992 = vsel %vm991, 0.0, %v983
    %vm993 = vcmp.eq.s32.totalorder %v988, 3
    %v994 = vsel %vm993, 1, 0
    %vm995 = vcmp.eq.s32.totalorder %v994, 1
    %v996 = vsel %vm995, 0.0, %v985
    %v997 = vld [vmem:[%s2] sm:$0xff]
    %v998 = vld [vmem:[%s2 + $0x8] sm:$0xff]
    %s999 = scalar_lea.vmem %s2, 16
    %v1000 = vld [vmem:[%s999] sm:$0xff]
    %v1001 = vld [vmem:[%s999 + $0x8] sm:$0xff]
    %v1003 = vsel %vm474, %v984, 0
    %1005 = vmatprep.subr.mxu0 0.0
    %1006 = vmatpush1.msra.mxu0 %v1000
    %1007 = vmatprep.subr.mxu0 0.0
    %1008 = vmatpush1.msra.mxu0 %v1001
    %1009 = vmatprep.subr.mxu0 0.0
    %1010 = vmatpush1.msra.mxu0 0.0
    %1011 = vmatprep.subr.mxu0 0.0
    %1012 = vmatpush1.msra.mxu0 0.0
    %1013 = vmatprep.subr.mxu0 0.0
    %1014 = vmatpush1.msra.mxu0 0.0
    %1015 = vmatprep.subr.mxu0 0.0
    %1016 = vmatpush1.msra.mxu0 0.0
    %1017 = vmatprep.subr.mxu0 0.0
    %1018 = vmatpush1.msra.mxu0 0.0
    %1019 = vmatprep.subr.mxu0 0.0
    %1020 = vmatpush1.msra.mxu0 0.0
    %1021 = vmatprep.subr.mxu0 0.0
    %1022 = vmatpush1.msra.mxu0 0.0
    %1023 = vmatprep.subr.mxu0 0.0
    %1024 = vmatpush1.msra.mxu0 0.0
    %1025 = vmatprep.subr.mxu0 0.0
    %1026 = vmatpush1.msra.mxu0 0.0
    %1027 = vmatprep.subr.mxu0 0.0
    %1028 = vmatpush1.msra.mxu0 0.0
    %1029 = vmatprep.subr.mxu0 0.0
    %1030 = vmatpush1.msra.mxu0 0.0
    %1031 = vmatprep.subr.mxu0 0.0
    %1032 = vmatpush1.msra.mxu0 0.0
    %1033 = vmatprep.subr.mxu0 0.0
    %1034 = vmatpush1.msra.mxu0 0.0
    %1035 = vmatprep.subr.mxu0 0.0
    %1036 = vmatpush1.msra.mxu0 0.0
    %1037 = vmatprep.subr.mxu0 0.0
    %1038 = vmatpush1.msra.mxu0 0.0
    %1039 = vmatprep.subr.mxu0 0.0
    %1040 = vmatpush1.msra.mxu0 0.0
    %1041 = vmatprep.subr.mxu0 0.0
    %1042 = vmatpush1.msra.mxu0 0.0
    %1043 = vmatprep.subr.mxu0 0.0
    %1044 = vmatpush1.msra.mxu0 0.0
    %1045 = vmatprep.subr.mxu0 0.0
    %1046 = vmatpush1.msra.mxu0 0.0
    %1047 = vmatprep.subr.mxu0 0.0
    %1048 = vmatpush1.msra.mxu0 0.0
    %1049 = vmatprep.subr.mxu0 0.0
    %1050 = vmatpush1.msra.mxu0 0.0
    %1051 = vmatprep.subr.mxu0 0.0
    %1052 = vmatpush1.msra.mxu0 0.0
    %1053 = vmatprep.subr.mxu0 0.0
    %1054 = vmatpush1.msra.mxu0 0.0
    %1055 = vmatprep.subr.mxu0 0.0
    %1056 = vmatpush1.msra.mxu0 0.0
    %1057 = vmatprep.subr.mxu0 0.0
    %1058 = vmatpush1.msra.mxu0 0.0
    %1059 = vmatprep.subr.mxu0 0.0
    %1060 = vmatpush1.msra.mxu0 0.0
    %1061 = vmatprep.subr.mxu0 0.0
    %1062 = vmatpush1.msra.mxu0 0.0
    %1063 = vmatprep.subr.mxu0 0.0
    %1064 = vmatpush1.msra.mxu0 0.0
    %1065 = vmatprep.subr.mxu0 0.0
    %1066 = vmatpush1.msra.mxu0 0.0
    %1067 = vmatprep.subr.mxu0 0.0
    %1068 = vmatpush1.msra.mxu0 0.0
    %1069 = vmatprep.mubr.f32.mxu0 0.0
    %1070 = vmatmul.mubr.f32.gmra.mrb[0].mxu0 %v1003
    %v1071 = vpop.f32.mrb[0].mxu0
    %v1072 = vadd.f32 0.0, %v1071
    %v1073 = vpop.f32.mrb[0].mxu0
    %1074 = vdwg.mxu0
    %v1076 = vsel %vm474, %v992, 0
    %1078 = vmatprep.subr.mxu0 0.0
    %1079 = vmatpush1.msra.mxu0 %v997
    %1080 = vmatprep.subr.mxu0 0.0
    %1081 = vmatpush1.msra.mxu0 %v998
    %1082 = vmatprep.subr.mxu0 0.0
    %1083 = vmatpush1.msra.mxu0 0.0
    %1084 = vmatprep.subr.mxu0 0.0
    %1085 = vmatpush1.msra.mxu0 0.0
    %1086 = vmatprep.subr.mxu0 0.0
    %1087 = vmatpush1.msra.mxu0 0.0
    %1088 = vmatprep.subr.mxu0 0.0
    %1089 = vmatpush1.msra.mxu0 0.0
    %1090 = vmatprep.subr.mxu0 0.0
    %1091 = vmatpush1.msra.mxu0 0.0
    %1092 = vmatprep.subr.mxu0 0.0
    %1093 = vmatpush1.msra.mxu0 0.0
    %1094 = vmatprep.subr.mxu0 0.0
    %1095 = vmatpush1.msra.mxu0 0.0
    %1096 = vmatprep.subr.mxu0 0.0
    %1097 = vmatpush1.msra.mxu0 0.0
    %1098 = vmatprep.subr.mxu0 0.0
    %1099 = vmatpush1.msra.mxu0 0.0
    %1100 = vmatprep.subr.mxu0 0.0
    %1101 = vmatpush1.msra.mxu0 0.0
    %1102 = vmatprep.subr.mxu0 0.0
    %1103 = vmatpush1.msra.mxu0 0.0
    %1104 = vmatprep.subr.mxu0 0.0
    %1105 = vmatpush1.msra.mxu0 0.0
    %1106 = vmatprep.subr.mxu0 0.0
    %1107 = vmatpush1.msra.mxu0 0.0
    %1108 = vmatprep.subr.mxu0 0.0
    %1109 = vmatpush1.msra.mxu0 0.0
    %1110 = vmatprep.subr.mxu0 0.0
    %1111 = vmatpush1.msra.mxu0 0.0
    %1112 = vmatprep.subr.mxu0 0.0
    %1113 = vmatpush1.msra.mxu0 0.0
    %1114 = vmatprep.subr.mxu0 0.0
    %1115 = vmatpush1.msra.mxu0 0.0
    %1116 = vmatprep.subr.mxu0 0.0
    %1117 = vmatpush1.msra.mxu0 0.0
    %1118 = vmatprep.subr.mxu0 0.0
    %1119 = vmatpush1.msra.mxu0 0.0
    %1120 = vmatprep.subr.mxu0 0.0
    %1121 = vmatpush1.msra.mxu0 0.0
    %1122 = vmatprep.subr.mxu0 0.0
    %1123 = vmatpush1.msra.mxu0 0.0
    %1124 = vmatprep.subr.mxu0 0.0
    %1125 = vmatpush1.msra.mxu0 0.0
    %1126 = vmatprep.subr.mxu0 0.0
    %1127 = vmatpush1.msra.mxu0 0.0
    %1128 = vmatprep.subr.mxu0 0.0
    %1129 = vmatpush1.msra.mxu0 0.0
    %1130 = vmatprep.subr.mxu0 0.0
    %1131 = vmatpush1.msra.mxu0 0.0
    %1132 = vmatprep.subr.mxu0 0.0
    %1133 = vmatpush1.msra.mxu0 0.0
    %1134 = vmatprep.subr.mxu0 0.0
    %1135 = vmatpush1.msra.mxu0 0.0
    %1136 = vmatprep.subr.mxu0 0.0
    %1137 = vmatpush1.msra.mxu0 0.0
    %1138 = vmatprep.subr.mxu0 0.0
    %1139 = vmatpush1.msra.mxu0 0.0
    %1140 = vmatprep.subr.mxu0 0.0
    %1141 = vmatpush1.msra.mxu0 0.0
    %1142 = vmatprep.mubr.f32.mxu0 0.0
    %1143 = vmatmul.mubr.f32.gmra.mrb[0].mxu0 %v1076
    %v1144 = vpop.f32.mrb[0].mxu0
    %v1145 = vadd.f32 %v1072, %v1144
    %v1146 = vpop.f32.mrb[0].mxu0
    %1147 = vdwg.mxu0
    %s1148 = scalar_lea.vmem %s2, 32
    %v1149 = vld [vmem:[%s1148] sm:$0xff]
    %v1150 = vld [vmem:[%s1148 + $0x8] sm:$0xff]
    %v1152 = vsel %vm474, %v996, 0
    %1154 = vmatprep.subr.mxu0 0.0
    %1155 = vmatpush1.msra.mxu0 %v1149
    %1156 = vmatprep.subr.mxu0 0.0
    %1157 = vmatpush1.msra.mxu0 %v1150
    %1158 = vmatprep.subr.mxu0 0.0
    %1159 = vmatpush1.msra.mxu0 0.0
    %1160 = vmatprep.subr.mxu0 0.0
    %1161 = vmatpush1.msra.mxu0 0.0
    %1162 = vmatprep.subr.mxu0 0.0
    %1163 = vmatpush1.msra.mxu0 0.0
    %1164 = vmatprep.subr.mxu0 0.0
    %1165 = vmatpush1.msra.mxu0 0.0
    %1166 = vmatprep.subr.mxu0 0.0
    %1167 = vmatpush1.msra.mxu0 0.0
    %1168 = vmatprep.subr.mxu0 0.0
    %1169 = vmatpush1.msra.mxu0 0.0
    %1170 = vmatprep.subr.mxu0 0.0
    %1171 = vmatpush1.msra.mxu0 0.0
    %1172 = vmatprep.subr.mxu0 0.0
    %1173 = vmatpush1.msra.mxu0 0.0
    %1174 = vmatprep.subr.mxu0 0.0
    %1175 = vmatpush1.msra.mxu0 0.0
    %1176 = vmatprep.subr.mxu0 0.0
    %1177 = vmatpush1.msra.mxu0 0.0
    %1178 = vmatprep.subr.mxu0 0.0
    %1179 = vmatpush1.msra.mxu0 0.0
    %1180 = vmatprep.subr.mxu0 0.0
    %1181 = vmatpush1.msra.mxu0 0.0
    %1182 = vmatprep.subr.mxu0 0.0
    %1183 = vmatpush1.msra.mxu0 0.0
    %1184 = vmatprep.subr.mxu0 0.0
    %1185 = vmatpush1.msra.mxu0 0.0
    %1186 = vmatprep.subr.mxu0 0.0
    %1187 = vmatpush1.msra.mxu0 0.0
    %1188 = vmatprep.subr.mxu0 0.0
    %1189 = vmatpush1.msra.mxu0 0.0
    %1190 = vmatprep.subr.mxu0 0.0
    %1191 = vmatpush1.msra.mxu0 0.0
    %1192 = vmatprep.subr.mxu0 0.0
    %1193 = vmatpush1.msra.mxu0 0.0
    %1194 = vmatprep.subr.mxu0 0.0
    %1195 = vmatpush1.msra.mxu0 0.0
    %1196 = vmatprep.subr.mxu0 0.0
    %1197 = vmatpush1.msra.mxu0 0.0
    %1198 = vmatprep.subr.mxu0 0.0
    %1199 = vmatpush1.msra.mxu0 0.0
    %1200 = vmatprep.subr.mxu0 0.0
    %1201 = vmatpush1.msra.mxu0 0.0
    %1202 = vmatprep.subr.mxu0 0.0
    %1203 = vmatpush1.msra.mxu0 0.0
    %1204 = vmatprep.subr.mxu0 0.0
    %1205 = vmatpush1.msra.mxu0 0.0
    %1206 = vmatprep.subr.mxu0 0.0
    %1207 = vmatpush1.msra.mxu0 0.0
    %1208 = vmatprep.subr.mxu0 0.0
    %1209 = vmatpush1.msra.mxu0 0.0
    %1210 = vmatprep.subr.mxu0 0.0
    %1211 = vmatpush1.msra.mxu0 0.0
    %1212 = vmatprep.subr.mxu0 0.0
    %1213 = vmatpush1.msra.mxu0 0.0
    %1214 = vmatprep.subr.mxu0 0.0
    %1215 = vmatpush1.msra.mxu0 0.0
    %1216 = vmatprep.subr.mxu0 0.0
    %1217 = vmatpush1.msra.mxu0 0.0
    %1218 = vmatprep.mubr.f32.mxu0 0.0
    %1219 = vmatmul.mubr.f32.gmra.mrb[0].mxu0 %v1152
    %v1220 = vpop.f32.mrb[0].mxu0
    %v1221 = vadd.f32 0.0, %v1220
    %v1222 = vpop.f32.mrb[0].mxu0
    %1223 = vdwg.mxu0
    %v1224 = vadd.f32 %v1145, %v1221
    %v1225 = vld [vmem:[%s6 + $0x2] sm:$0x1]
    %v1226 = vld [vmem:[%s6 + $0x3] sm:$0x1]
    %vm1227 = vcmask 261120
    %v1228 = vsel %vm1227, %v1224, 0.0
    %v1229 = vrot.slane %v1228, 4
    %v1230 = vadd.f32 %v1228, %v1229
    %v1231 = vrot.slane %v1230, 2
    %v1232 = vadd.f32 %v1230, %v1231
    %v1233 = vrot.slane %v1232, 1
    %v1234 = vadd.f32 %v1232, %v1233
    %v1235 = vrcp.pop 8.0
    %v1236 = vmul.f32 %v1234, %v1235
    %v1237 = vsub.f32 %v1224, %v1236
    %v1238 = vmul.f32 %v1237, %v1237
    %v1239 = vsel %vm1227, %v1238, 0.0
    %v1240 = vrot.slane %v1239, 4
    %v1241 = vadd.f32 %v1239, %v1240
    %v1242 = vrot.slane %v1241, 2
    %v1243 = vadd.f32 %v1241, %v1242
    %v1244 = vrot.slane %v1243, 1
    %v1245 = vadd.f32 %v1243, %v1244
    %v1246 = vmul.f32 %v1245, %v1235
    %v1247 = vadd.f32 %v1246, 1e-05
    %v1248 = vrsqrt.pop %v1247
    %v1249 = vmul.f32 %v1237, %v1248
    %v1250 = vlaneseq
    %v1251 = vshrl.u32 %v1250, 7
    %v1252 = vsub.s32 0, %v1251
    %v1253 = vrot.slane %v1225, %v1252
    %v1254 = vmul.f32 %v1249, %v1253
    %v1255 = vlaneseq
    %v1256 = vshrl.u32 %v1255, 7
    %v1257 = vsub.s32 0, %v1256
    %v1258 = vrot.slane %v1226, %v1257
    %v1259 = vadd.f32 %v1254, %v1258
    %v1260 = vmax.f32 %v1259, 0.0
    %1261 = vst.msk [vmem:[#allocation2] sm:$0xff] %vm1227, %v1260
    %v1262 = vld [vmem:[#allocation2] ss:$2 sm:$0xf]
    %v1263 = vld [vmem:[%s976] ss:$2 sm:$0xf]
    %v1264 = vmax.f32 %v1262, %v1263
    %vm1265 = vcmask 257024
    %1266 = vst.msk [vmem:[#allocation2 + $0x1] sm:$0xf] %vm1265, %v1264
    %vm1267 = vcmask 253952
    %1268 = vst.msk [vmem:[#allocation2] sm:$0x1] %vm1267, 0.0
    %1269 = vst.msk [vmem:[#allocation2 + $0x5] sm:$0x1] %vm1267, 0.0
    %v1270 = vld [vmem:[#allocation2] sm:$0xf]
    %v1271 = vld [vmem:[#allocation2 + $0x1] sm:$0xf]
    %v1272 = vld [vmem:[#allocation2 + $0x2] sm:$0xf]
    %v1273 = vand.u32 %v987, 1
    %vm1274 = vcmp.eq.s32.totalorder %v1273, 0
    %v1275 = vsel %vm1274, 1, 0
    %vm1276 = vcmp.eq.s32.totalorder %v1275, 1
    %v1277 = vsel %vm1276, 0.0, %v1270
    %vm1278 = vcmp.eq.s32.totalorder %v1273, 1
    %v1279 = vsel %vm1278, 1, 0
    %vm1280 = vcmp.eq.s32.totalorder %v1279, 1
    %v1281 = vsel %vm1280, 0.0, %v1272
    %v1282 = vld [vmem:[%s3] sm:$0xff]
    %v1283 = vld [vmem:[%s3 + $0x8] sm:$0xff]
    %v1284 = vld [vmem:[%s3 + $0x10] sm:$0xff]
    %v1285 = vld [vmem:[%s3 + $0x18] sm:$0xff]
    %s1286 = scalar_lea.vmem %s3, 32
    %v1287 = vld [vmem:[%s1286] sm:$0xff]
    %v1288 = vld [vmem:[%s1286 + $0x8] sm:$0xff]
    %v1289 = vld [vmem:[%s1286 + $0x10] sm:$0xff]
    %v1290 = vld [vmem:[%s1286 + $0x18] sm:$0xff]
    %v1292 = vsel %vm1227, %v1271, 0
    %1294 = vmatprep.subr.mxu0 0.0
    %1295 = vmatpush1.msra.mxu0 %v1287
    %1296 = vmatprep.subr.mxu0 0.0
    %1297 = vmatpush1.msra.mxu0 %v1288
    %1298 = vmatprep.subr.mxu0 0.0
    %1299 = vmatpush1.msra.mxu0 %v1289
    %1300 = vmatprep.subr.mxu0 0.0
    %1301 = vmatpush1.msra.mxu0 %v1290
    %1302 = vmatprep.subr.mxu0 0.0
    %1303 = vmatpush1.msra.mxu0 0.0
    %1304 = vmatprep.subr.mxu0 0.0
    %1305 = vmatpush1.msra.mxu0 0.0
    %1306 = vmatprep.subr.mxu0 0.0
    %1307 = vmatpush1.msra.mxu0 0.0
    %1308 = vmatprep.subr.mxu0 0.0
    %1309 = vmatpush1.msra.mxu0 0.0
    %1310 = vmatprep.subr.mxu0 0.0
    %1311 = vmatpush1.msra.mxu0 0.0
    %1312 = vmatprep.subr.mxu0 0.0
    %1313 = vmatpush1.msra.mxu0 0.0
    %1314 = vmatprep.subr.mxu0 0.0
    %1315 = vmatpush1.msra.mxu0 0.0
    %1316 = vmatprep.subr.mxu0 0.0
    %1317 = vmatpush1.msra.mxu0 0.0
    %1318 = vmatprep.subr.mxu0 0.0
    %1319 = vmatpush1.msra.mxu0 0.0
    %1320 = vmatprep.subr.mxu0 0.0
    %1321 = vmatpush1.msra.mxu0 0.0
    %1322 = vmatprep.subr.mxu0 0.0
    %1323 = vmatpush1.msra.mxu0 0.0
    %1324 = vmatprep.subr.mxu0 0.0
    %1325 = vmatpush1.msra.mxu0 0.0
    %1326 = vmatprep.subr.mxu0 0.0
    %1327 = vmatpush1.msra.mxu0 0.0
    %1328 = vmatprep.subr.mxu0 0.0
    %1329 = vmatpush1.msra.mxu0 0.0
    %1330 = vmatprep.subr.mxu0 0.0
    %1331 = vmatpush1.msra.mxu0 0.0
    %1332 = vmatprep.subr.mxu0 0.0
    %1333 = vmatpush1.msra.mxu0 0.0
    %1334 = vmatprep.subr.mxu0 0.0
    %1335 = vmatpush1.msra.mxu0 0.0
    %1336 = vmatprep.subr.mxu0 0.0
    %1337 = vmatpush1.msra.mxu0 0.0
    %1338 = vmatprep.subr.mxu0 0.0
    %1339 = vmatpush1.msra.mxu0 0.0
    %1340 = vmatprep.subr.mxu0 0.0
    %1341 = vmatpush1.msra.mxu0 0.0
    %1342 = vmatprep.subr.mxu0 0.0
    %1343 = vmatpush1.msra.mxu0 0.0
    %1344 = vmatprep.subr.mxu0 0.0
    %1345 = vmatpush1.msra.mxu0 0.0
    %1346 = vmatprep.subr.mxu0 0.0
    %1347 = vmatpush1.msra.mxu0 0.0
    %1348 = vmatprep.subr.mxu0 0.0
    %1349 = vmatpush1.msra.mxu0 0.0
    %1350 = vmatprep.subr.mxu0 0.0
    %1351 = vmatpush1.msra.mxu0 0.0
    %1352 = vmatprep.subr.mxu0 0.0
    %1353 = vmatpush1.msra.mxu0 0.0
    %1354 = vmatprep.subr.mxu0 0.0
    %1355 = vmatpush1.msra.mxu0 0.0
    %1356 = vmatprep.subr.mxu0 0.0
    %1357 = vmatpush1.msra.mxu0 0.0
    %1358 = vmatprep.mubr.f32.mxu0 0.0
    %1359 = vmatmul.mubr.f32.gmra.mrb[0].mxu0 %v1292
    %v1360 = vpop.f32.mrb[0].mxu0
    %v1361 = vadd.f32 0.0, %v1360
    %v1362 = vpop.f32.mrb[0].mxu0
    %1363 = vdwg.mxu0
    %v1365 = vsel %vm1227, %v1277, 0
    %1367 = vmatprep.subr.mxu0 0.0
    %1368 = vmatpush1.msra.mxu0 %v1282
    %1369 = vmatprep.subr.mxu0 0.0
    %1370 = vmatpush1.msra.mxu0 %v1283
    %1371 = vmatprep.subr.mxu0 0.0
    %1372 = vmatpush1.msra.mxu0 %v1284
    %1373 = vmatprep.subr.mxu0 0.0
    %1374 = vmatpush1.msra.mxu0 %v1285
    %1375 = vmatprep.subr.mxu0 0.0
    %1376 = vmatpush1.msra.mxu0 0.0
    %1377 = vmatprep.subr.mxu0 0.0
    %1378 = vmatpush1.msra.mxu0 0.0
    %1379 = vmatprep.subr.mxu0 0.0
    %1380 = vmatpush1.msra.mxu0 0.0
    %1381 = vmatprep.subr.mxu0 0.0
    %1382 = vmatpush1.msra.mxu0 0.0
    %1383 = vmatprep.subr.mxu0 0.0
    %1384 = vmatpush1.msra.mxu0 0.0
    %1385 = vmatprep.subr.mxu0 0.0
    %1386 = vmatpush1.msra.mxu0 0.0
    %1387 = vmatprep.subr.mxu0 0.0
    %1388 = vmatpush1.msra.mxu0 0.0
    %1389 = vmatprep.subr.mxu0 0.0
    %1390 = vmatpush1.msra.mxu0 0.0
    %1391 = vmatprep.subr.mxu0 0.0
    %1392 = vmatpush1.msra.mxu0 0.0
    %1393 = vmatprep.subr.mxu0 0.0
    %1394 = vmatpush1.msra.mxu0 0.0
    %1395 = vmatprep.subr.mxu0 0.0
    %1396 = vmatpush1.msra.mxu0 0.0
    %1397 = vmatprep.subr.mxu0 0.0
    %1398 = vmatpush1.msra.mxu0 0.0
    %1399 = vmatprep.subr.mxu0 0.0
    %1400 = vmatpush1.msra.mxu0 0.0
    %1401 = vmatprep.subr.mxu0 0.0
    %1402 = vmatpush1.msra.mxu0 0.0
    %1403 = vmatprep.subr.mxu0 0.0
    %1404 = vmatpush1.msra.mxu0 0.0
    %1405 = vmatprep.subr.mxu0 0.0
    %1406 = vmatpush1.msra.mxu0 0.0
    %1407 = vmatprep.subr.mxu0 0.0
    %1408 = vmatpush1.msra.mxu0 0.0
    %1409 = vmatprep.subr.mxu0 0.0
    %1410 = vmatpush1.msra.mxu0 0.0
    %1411 = vmatprep.subr.mxu0 0.0
    %1412 = vmatpush1.msra.mxu0 0.0
    %1413 = vmatprep.subr.mxu0 0.0
    %1414 = vmatpush1.msra.mxu0 0.0
    %1415 = vmatprep.subr.mxu0 0.0
    %1416 = vmatpush1.msra.mxu0 0.0
    %1417 = vmatprep.subr.mxu0 0.0
    %1418 = vmatpush1.msra.mxu0 0.0
    %1419 = vmatprep.subr.mxu0 0.0
    %1420 = vmatpush1.msra.mxu0 0.0
    %1421 = vmatprep.subr.mxu0 0.0
    %1422 = vmatpush1.msra.mxu0 0.0
    %1423 = vmatprep.subr.mxu0 0.0
    %1424 = vmatpush1.msra.mxu0 0.0
    %1425 = vmatprep.subr.mxu0 0.0
    %1426 = vmatpush1.msra.mxu0 0.0
    %1427 = vmatprep.subr.mxu0 0.0
    %1428 = vmatpush1.msra.mxu0 0.0
    %1429 = vmatprep.subr.mxu0 0.0
    %1430 = vmatpush1.msra.mxu0 0.0
    %1431 = vmatprep.mubr.f32.mxu0 0.0
    %1432 = vmatmul.mubr.f32.gmra.mrb[0].mxu0 %v1365
    %v1433 = vpop.f32.mrb[0].mxu0
    %v1434 = vadd.f32 %v1361, %v1433
    %v1435 = vpop.f32.mrb[0].mxu0
    %1436 = vdwg.mxu0
    %s1437 = scalar_lea.vmem %s3, 64
    %v1438 = vld [vmem:[%s1437] sm:$0xff]
    %v1439 = vld [vmem:[%s1437 + $0x8] sm:$0xff]
    %v1440 = vld [vmem:[%s1437 + $0x10] sm:$0xff]
    %v1441 = vld [vmem:[%s1437 + $0x18] sm:$0xff]
    %v1443 = vsel %vm1227, %v1281, 0
    %1445 = vmatprep.subr.mxu0 0.0
    %1446 = vmatpush1.msra.mxu0 %v1438
    %1447 = vmatprep.subr.mxu0 0.0
    %1448 = vmatpush1.msra.mxu0 %v1439
    %1449 = vmatprep.subr.mxu0 0.0
    %1450 = vmatpush1.msra.mxu0 %v1440
    %1451 = vmatprep.subr.mxu0 0.0
    %1452 = vmatpush1.msra.mxu0 %v1441
    %1453 = vmatprep.subr.mxu0 0.0
    %1454 = vmatpush1.msra.mxu0 0.0
    %1455 = vmatprep.subr.mxu0 0.0
    %1456 = vmatpush1.msra.mxu0 0.0
    %1457 = vmatprep.subr.mxu0 0.0
    %1458 = vmatpush1.msra.mxu0 0.0
    %1459 = vmatprep.subr.mxu0 0.0
    %1460 = vmatpush1.msra.mxu0 0.0
    %1461 = vmatprep.subr.mxu0 0.0
    %1462 = vmatpush1.msra.mxu0 0.0
    %1463 = vmatprep.subr.mxu0 0.0
    %1464 = vmatpush1.msra.mxu0 0.0
    %1465 = vmatprep.subr.mxu0 0.0
    %1466 = vmatpush1.msra.mxu0 0.0
    %1467 = vmatprep.subr.mxu0 0.0
    %1468 = vmatpush1.msra.mxu0 0.0
    %1469 = vmatprep.subr.mxu0 0.0
    %1470 = vmatpush1.msra.mxu0 0.0
    %1471 = vmatprep.subr.mxu0 0.0
    %1472 = vmatpush1.msra.mxu0 0.0
    %1473 = vmatprep.subr.mxu0 0.0
    %1474 = vmatpush1.msra.mxu0 0.0
    %1475 = vmatprep.subr.mxu0 0.0
    %1476 = vmatpush1.msra.mxu0 0.0
    %1477 = vmatprep.subr.mxu0 0.0
    %1478 = vmatpush1.msra.mxu0 0.0
    %1479 = vmatprep.subr.mxu0 0.0
    %1480 = vmatpush1.msra.mxu0 0.0
    %1481 = vmatprep.subr.mxu0 0.0
    %1482 = vmatpush1.msra.mxu0 0.0
    %1483 = vmatprep.subr.mxu0 0.0
    %1484 = vmatpush1.msra.mxu0 0.0
    %1485 = vmatprep.subr.mxu0 0.0
    %1486 = vmatpush1.msra.mxu0 0.0
    %1487 = vmatprep.subr.mxu0 0.0
    %1488 = vmatpush1.msra.mxu0 0.0
    %1489 = vmatprep.subr.mxu0 0.0
    %1490 = vmatpush1.msra.mxu0 0.0
    %1491 = vmatprep.subr.mxu0 0.0
    %1492 = vmatpush1.msra.mxu0 0.0
    %1493 = vmatprep.subr.mxu0 0.0
    %1494 = vmatpush1.msra.mxu0 0.0
    %1495 = vmatprep.subr.mxu0 0.0
    %1496 = vmatpush1.msra.mxu0 0.0
    %1497 = vmatprep.subr.mxu0 0.0
    %1498 = vmatpush1.msra.mxu0 0.0
    %1499 = vmatprep.subr.mxu0 0.0
    %1500 = vmatpush1.msra.mxu0 0.0
    %1501 = vmatprep.subr.mxu0 0.0
    %1502 = vmatpush1.msra.mxu0 0.0
    %1503 = vmatprep.subr.mxu0 0.0
    %1504 = vmatpush1.msra.mxu0 0.0
    %1505 = vmatprep.subr.mxu0 0.0
    %1506 = vmatpush1.msra.mxu0 0.0
    %1507 = vmatprep.subr.mxu0 0.0
    %1508 = vmatpush1.msra.mxu0 0.0
    %1509 = vmatprep.mubr.f32.mxu0 0.0
    %1510 = vmatmul.mubr.f32.gmra.mrb[0].mxu0 %v1443
    %v1511 = vpop.f32.mrb[0].mxu0
    %v1512 = vadd.f32 0.0, %v1511
    %v1513 = vpop.f32.mrb[0].mxu0
    %1514 = vdwg.mxu0
    %v1515 = vadd.f32 %v1434, %v1512
    %v1516 = vld [vmem:[%s6 + $0x4] sm:$0x1]
    %v1517 = vld [vmem:[%s6 + $0x5] sm:$0x1]
    %vm1518 = vcmask 519168
    %v1519 = vsel %vm1518, %v1515, 0.0
    %v1520 = vrot.slane %v1519, 4
    %v1521 = vadd.f32 %v1519, %v1520
    %v1522 = vrot.slane %v1521, 2
    %v1523 = vadd.f32 %v1521, %v1522
    %v1524 = vrot.slane %v1523, 1
    %v1525 = vadd.f32 %v1523, %v1524
    %v1526 = vrcp.pop 4.0
    %v1527 = vmul.f32 %v1525, %v1526
    %v1528 = vsub.f32 %v1515, %v1527
    %v1529 = vmul.f32 %v1528, %v1528
    %v1530 = vsel %vm1518, %v1529, 0.0
    %v1531 = vrot.slane %v1530, 4
    %v1532 = vadd.f32 %v1530, %v1531
    %v1533 = vrot.slane %v1532, 2
    %v1534 = vadd.f32 %v1532, %v1533
    %v1535 = vrot.slane %v1534, 1
    %v1536 = vadd.f32 %v1534, %v1535
    %v1537 = vmul.f32 %v1536, %v1526
    %v1538 = vadd.f32 %v1537, 1e-05
    %v1539 = vrsqrt.pop %v1538
    %v1540 = vmul.f32 %v1528, %v1539
    %v1541 = vlaneseq
    %v1542 = vshrl.u32 %v1541, 7
    %v1543 = vsub.s32 0, %v1542
    %v1544 = vrot.slane %v1516, %v1543
    %v1545 = vmul.f32 %v1540, %v1544
    %v1546 = vlaneseq
    %v1547 = vshrl.u32 %v1546, 7
    %v1548 = vsub.s32 0, %v1547
    %v1549 = vrot.slane %v1517, %v1548
    %v1550 = vadd.f32 %v1545, %v1549
    %v1551 = vmax.f32 %v1550, 0.0
    %1552 = vst.msk [vmem:[#allocation2] sm:$0xf] %vm1518, %v1551
    %v1553 = vld [vmem:[#allocation2] ss:$2 sm:$0x3]
    %v1554 = vld [vmem:[%s976] ss:$2 sm:$0x3]
    %v1555 = vmax.f32 %v1553, %v1554
    %v1556 = vld [vmem:[%s4] sm:$0xff]
    %v1557 = vld [vmem:[%s4 + $0x8] sm:$0xff]
    %v1558 = vld [vmem:[%s4 + $0x10] sm:$0xff]
    %v1559 = vld [vmem:[%s4 + $0x18] sm:$0xff]
    %v1560 = vld [vmem:[%s4 + $0x20] sm:$0xff]
    %v1561 = vld [vmem:[%s4 + $0x28] sm:$0xff]
    %v1562 = vld [vmem:[%s4 + $0x30] sm:$0xff]
    %v1563 = vld [vmem:[%s4 + $0x38] sm:$0xff]
    %v1565 = vsel %vm100, %v1555, 0
    %1567 = vmatprep.subr.mxu0 0.0
    %1568 = vmatpush1.msra.mxu0 %v1556
    %1569 = vmatprep.subr.mxu0 0.0
    %1570 = vmatpush1.msra.mxu0 %v1557
    %1571 = vmatprep.subr.mxu0 0.0
    %1572 = vmatpush1.msra.mxu0 %v1558
    %1573 = vmatprep.subr.mxu0 0.0
    %1574 = vmatpush1.msra.mxu0 %v1559
    %1575 = vmatprep.subr.mxu0 0.0
    %1576 = vmatpush1.msra.mxu0 %v1560
    %1577 = vmatprep.subr.mxu0 0.0
    %1578 = vmatpush1.msra.mxu0 %v1561
    %1579 = vmatprep.subr.mxu0 0.0
    %1580 = vmatpush1.msra.mxu0 %v1562
    %1581 = vmatprep.subr.mxu0 0.0
    %1582 = vmatpush1.msra.mxu0 %v1563
    %1583 = vmatprep.subr.mxu0 0.0
    %1584 = vmatpush1.msra.mxu0 0.0
    %1585 = vmatprep.subr.mxu0 0.0
    %1586 = vmatpush1.msra.mxu0 0.0
    %1587 = vmatprep.subr.mxu0 0.0
    %1588 = vmatpush1.msra.mxu0 0.0
    %1589 = vmatprep.subr.mxu0 0.0
    %1590 = vmatpush1.msra.mxu0 0.0
    %1591 = vmatprep.subr.mxu0 0.0
    %1592 = vmatpush1.msra.mxu0 0.0
    %1593 = vmatprep.subr.mxu0 0.0
    %1594 = vmatpush1.msra.mxu0 0.0
    %1595 = vmatprep.subr.mxu0 0.0
    %1596 = vmatpush1.msra.mxu0 0.0
    %1597 = vmatprep.subr.mxu0 0.0
    %1598 = vmatpush1.msra.mxu0 0.0
    %1599 = vmatprep.subr.mxu0 0.0
    %1600 = vmatpush1.msra.mxu0 0.0
    %1601 = vmatprep.subr.mxu0 0.0
    %1602 = vmatpush1.msra.mxu0 0.0
    %1603 = vmatprep.subr.mxu0 0.0
    %1604 = vmatpush1.msra.mxu0 0.0
    %1605 = vmatprep.subr.mxu0 0.0
    %1606 = vmatpush1.msra.mxu0 0.0
    %1607 = vmatprep.subr.mxu0 0.0
    %1608 = vmatpush1.msra.mxu0 0.0
    %1609 = vmatprep.subr.mxu0 0.0
    %1610 = vmatpush1.msra.mxu0 0.0
    %1611 = vmatprep.subr.mxu0 0.0
    %1612 = vmatpush1.msra.mxu0 0.0
    %1613 = vmatprep.subr.mxu0 0.0
    %1614 = vmatpush1.msra.mxu0 0.0
    %1615 = vmatprep.subr.mxu0 0.0
    %1616 = vmatpush1.msra.mxu0 0.0
    %1617 = vmatprep.subr.mxu0 0.0
    %1618 = vmatpush1.msra.mxu0 0.0
    %1619 = vmatprep.subr.mxu0 0.0
    %1620 = vmatpush1.msra.mxu0 0.0
    %1621 = vmatprep.subr.mxu0 0.0
    %1622 = vmatpush1.msra.mxu0 0.0
    %1623 = vmatprep.subr.mxu0 0.0
    %1624 = vmatpush1.msra.mxu0 0.0
    %1625 = vmatprep.subr.mxu0 0.0
    %1626 = vmatpush1.msra.mxu0 0.0
    %1627 = vmatprep.subr.mxu0 0.0
    %1628 = vmatpush1.msra.mxu0 0.0
    %1629 = vmatprep.subr.mxu0 0.0
    %1630 = vmatpush1.msra.mxu0 0.0
    %1631 = vmatprep.mubr.f32.mxu0 0.0
    %1632 = vmatmul.mubr.f32.gmra.mrb[0].mxu0 %v1565
    %v1633 = vpop.f32.mrb[0].mxu0
    %v1634 = vadd.f32 0.0, %v1633
    %v1635 = vpop.f32.mrb[0].mxu0
    %1636 = vdwg.mxu0
    %v1637 = vld [vmem:[%s6 + $0x6] sm:$0x1]
    %v1638 = vld [vmem:[%s6 + $0x7] sm:$0x1]
    %vm1639 = vcmask 517120
    %v1640 = vsel %vm1639, %v1634, 0.0
    %v1641 = vrot.slane %v1640, 4
    %v1642 = vadd.f32 %v1640, %v1641
    %v1643 = vrot.slane %v1642, 2
    %v1644 = vadd.f32 %v1642, %v1643
    %v1645 = vrot.slane %v1644, 1
    %v1646 = vadd.f32 %v1644, %v1645
    %v1647 = vrcp.pop 2.0
    %v1648 = vmul.f32 %v1646, %v1647
    %v1649 = vsub.f32 %v1634, %v1648
    %v1650 = vmul.f32 %v1649, %v1649
    %v1651 = vsel %vm1639, %v1650, 0.0
    %v1652 = vrot.slane %v1651, 4
    %v1653 = vadd.f32 %v1651, %v1652
    %v1654 = vrot.slane %v1653, 2
    %v1655 = vadd.f32 %v1653, %v1654
    %v1656 = vrot.slane %v1655, 1
    %v1657 = vadd.f32 %v1655, %v1656
    %v1658 = vmul.f32 %v1657, %v1647
    %v1659 = vadd.f32 %v1658, 1e-05
    %v1660 = vrsqrt.pop %v1659
    %v1661 = vmul.f32 %v1649, %v1660
    %v1662 = vlaneseq
    %v1663 = vshrl.u32 %v1662, 7
    %v1664 = vsub.s32 0, %v1663
    %v1665 = vrot.slane %v1637, %v1664
    %v1666 = vmul.f32 %v1661, %v1665
    %v1667 = vlaneseq
    %v1668 = vshrl.u32 %v1667, 7
    %v1669 = vsub.s32 0, %v1668
    %v1670 = vrot.slane %v1638, %v1669
    %v1671 = vadd.f32 %v1666, %v1670
    %v1672 = vmax.f32 %v1671, 0.0
    %v1673 = vld [vmem:[%s5] sm:$0xff]
    %v1674 = vld [vmem:[%s5 + $0x8] sm:$0xff]
    %v1675 = vld [vmem:[%s5 + $0x10] sm:$0xff]
    %v1676 = vld [vmem:[%s5 + $0x18] sm:$0xff]
    %v1677 = vld [vmem:[%s5 + $0x20] sm:$0xff]
    %v1678 = vld [vmem:[%s5 + $0x28] sm:$0xff]
    %v1679 = vld [vmem:[%s5 + $0x30] sm:$0xff]
    %v1680 = vld [vmem:[%s5 + $0x38] sm:$0xff]
    %v1682 = vsel %vm100, %v1672, 0
    %1684 = vmatprep.subr.mxu0 0.0
    %1685 = vmatpush1.msra.mxu0 %v1673
    %1686 = vmatprep.subr.mxu0 0.0
    %1687 = vmatpush1.msra.mxu0 %v1674
    %1688 = vmatprep.subr.mxu0 0.0
    %1689 = vmatpush1.msra.mxu0 %v1675
    %1690 = vmatprep.subr.mxu0 0.0
    %1691 = vmatpush1.msra.mxu0 %v1676
    %1692 = vmatprep.subr.mxu0 0.0
    %1693 = vmatpush1.msra.mxu0 %v1677
    %1694 = vmatprep.subr.mxu0 0.0
    %1695 = vmatpush1.msra.mxu0 %v1678
    %1696 = vmatprep.subr.mxu0 0.0
    %1697 = vmatpush1.msra.mxu0 %v1679
    %1698 = vmatprep.subr.mxu0 0.0
    %1699 = vmatpush1.msra.mxu0 %v1680
    %1700 = vmatprep.subr.mxu0 0.0
    %1701 = vmatpush1.msra.mxu0 0.0
    %1702 = vmatprep.subr.mxu0 0.0
    %1703 = vmatpush1.msra.mxu0 0.0
    %1704 = vmatprep.subr.mxu0 0.0
    %1705 = vmatpush1.msra.mxu0 0.0
    %1706 = vmatprep.subr.mxu0 0.0
    %1707 = vmatpush1.msra.mxu0 0.0
    %1708 = vmatprep.subr.mxu0 0.0
    %1709 = vmatpush1.msra.mxu0 0.0
    %1710 = vmatprep.subr.mxu0 0.0
    %1711 = vmatpush1.msra.mxu0 0.0
    %1712 = vmatprep.subr.mxu0 0.0
    %1713 = vmatpush1.msra.mxu0 0.0
    %1714 = vmatprep.subr.mxu0 0.0
    %1715 = vmatpush1.msra.mxu0 0.0
    %1716 = vmatprep.subr.mxu0 0.0
    %1717 = vmatpush1.msra.mxu0 0.0
    %1718 = vmatprep.subr.mxu0 0.0
    %1719 = vmatpush1.msra.mxu0 0.0
    %1720 = vmatprep.subr.mxu0 0.0
    %1721 = vmatpush1.msra.mxu0 0.0
    %1722 = vmatprep.subr.mxu0 0.0
    %1723 = vmatpush1.msra.mxu0 0.0
    %1724 = vmatprep.subr.mxu0 0.0
    %1725 = vmatpush1.msra.mxu0 0.0
    %1726 = vmatprep.subr.mxu0 0.0
    %1727 = vmatpush1.msra.mxu0 0.0
    %1728 = vmatprep.subr.mxu0 0.0
    %1729 = vmatpush1.msra.mxu0 0.0
    %1730 = vmatprep.subr.mxu0 0.0
    %1731 = vmatpush1.msra.mxu0 0.0
    %1732 = vmatprep.subr.mxu0 0.0
    %1733 = vmatpush1.msra.mxu0 0.0
    %1734 = vmatprep.subr.mxu0 0.0
    %1735 = vmatpush1.msra.mxu0 0.0
    %1736 = vmatprep.subr.mxu0 0.0
    %1737 = vmatpush1.msra.mxu0 0.0
    %1738 = vmatprep.subr.mxu0 0.0
    %1739 = vmatpush1.msra.mxu0 0.0
    %1740 = vmatprep.subr.mxu0 0.0
    %1741 = vmatpush1.msra.mxu0 0.0
    %1742 = vmatprep.subr.mxu0 0.0
    %1743 = vmatpush1.msra.mxu0 0.0
    %1744 = vmatprep.subr.mxu0 0.0
    %1745 = vmatpush1.msra.mxu0 0.0
    %1746 = vmatprep.subr.mxu0 0.0
    %1747 = vmatpush1.msra.mxu0 0.0
    %1748 = vmatprep.mubr.f32.mxu0 0.0
    %1749 = vmatmul.mubr.f32.gmra.mrb[0].mxu0 %v1682
    %v1750 = vpop.f32.mrb[0].mxu0
    %v1751 = vadd.f32 0.0, %v1750
    %v1752 = vpop.f32.mrb[0].mxu0
    %1753 = vdwg.mxu0
    %v1754 = vld [vmem:[%s6 + $0x8] sm:$0x1]
    %v1755 = vld [vmem:[%s6 + $0x9] sm:$0x1]
    %v1756 = vsel %vm1639, %v1751, 0.0
    %v1757 = vrot.slane %v1756, 4
    %v1758 = vadd.f32 %v1756, %v1757
    %v1759 = vrot.slane %v1758, 2
    %v1760 = vadd.f32 %v1758, %v1759
    %v1761 = vrot.slane %v1760, 1
    %v1762 = vadd.f32 %v1760, %v1761
    %v1763 = vmul.f32 %v1762, %v1647
    %v1764 = vsub.f32 %v1751, %v1763
    %v1765 = vmul.f32 %v1764, %v1764
    %v1766 = vsel %vm1639, %v1765, 0.0
    %v1767 = vrot.slane %v1766, 4
    %v1768 = vadd.f32 %v1766, %v1767
    %v1769 = vrot.slane %v1768, 2
    %v1770 = vadd.f32 %v1768, %v1769
    %v1771 = vrot.slane %v1770, 1
    %v1772 = vadd.f32 %v1770, %v1771
    %v1773 = vmul.f32 %v1772, %v1647
    %v1774 = vadd.f32 %v1773, 1e-05
    %v1775 = vrsqrt.pop %v1774
    %v1776 = vmul.f32 %v1764, %v1775
    %v1777 = vlaneseq
    %v1778 = vshrl.u32 %v1777, 7
    %v1779 = vsub.s32 0, %v1778
    %v1780 = vrot.slane %v1754, %v1779
    %v1781 = vmul.f32 %v1776, %v1780
    %v1782 = vlaneseq
    %v1783 = vshrl.u32 %v1782, 7
    %v1784 = vsub.s32 0, %v1783
    %v1785 = vrot.slane %v1755, %v1784
    %v1786 = vadd.f32 %v1781, %v1785
    %v1787 = vmax.f32 %v1786, 0.0
    %v1788 = vld [vmem:[%s7] sm:$0xff]
    %v1789 = vld [vmem:[%s7 + $0x8] sm:$0xff]
    %v1790 = vld [vmem:[%s7 + $0x10] sm:$0xff]
    %v1791 = vld [vmem:[%s7 + $0x18] sm:$0xff]
    %v1792 = vld [vmem:[%s7 + $0x20] sm:$0xff]
    %v1793 = vld [vmem:[%s7 + $0x28] sm:$0xff]
    %v1794 = vld [vmem:[%s7 + $0x30] sm:$0xff]
    %v1795 = vld [vmem:[%s7 + $0x38] sm:$0xff]
    %v1796 = vld [vmem:[%s8] sm:$0x1]
    %v1798 = vlaneseq
    %v1799 = vshrl.u32 %v1798, 7
    %v1800 = vsub.s32 0, %v1799
    %v1801 = vrot.slane %v1796, %v1800
    %v1804 = vsel %vm100, %v1787, 0
    %1806 = vmatprep.subr.mxu0 0.0
    %1807 = vmatpush1.msra.mxu0 %v1788
    %1808 = vmatprep.subr.mxu0 0.0
    %1809 = vmatpush1.msra.mxu0 %v1789
    %1810 = vmatprep.subr.mxu0 0.0
    %1811 = vmatpush1.msra.mxu0 %v1790
    %1812 = vmatprep.subr.mxu0 0.0
    %1813 = vmatpush1.msra.mxu0 %v1791
    %1814 = vmatprep.subr.mxu0 0.0
    %1815 = vmatpush1.msra.mxu0 %v1792
    %1816 = vmatprep.subr.mxu0 0.0
    %1817 = vmatpush1.msra.mxu0 %v1793
    %1818 = vmatprep.subr.mxu0 0.0
    %1819 = vmatpush1.msra.mxu0 %v1794
    %1820 = vmatprep.subr.mxu0 0.0
    %1821 = vmatpush1.msra.mxu0 %v1795
    %1822 = vmatprep.subr.mxu0 0.0
    %1823 = vmatpush1.msra.mxu0 0.0
    %1824 = vmatprep.subr.mxu0 0.0
    %1825 = vmatpush1.msra.mxu0 0.0
    %1826 = vmatprep.subr.mxu0 0.0
    %1827 = vmatpush1.msra.mxu0 0.0
    %1828 = vmatprep.subr.mxu0 0.0
    %1829 = vmatpush1.msra.mxu0 0.0
    %1830 = vmatprep.subr.mxu0 0.0
    %1831 = vmatpush1.msra.mxu0 0.0
    %1832 = vmatprep.subr.mxu0 0.0
    %1833 = vmatpush1.msra.mxu0 0.0
    %1834 = vmatprep.subr.mxu0 0.0
    %1835 = vmatpush1.msra.mxu0 0.0
    %1836 = vmatprep.subr.mxu0 0.0
    %1837 = vmatpush1.msra.mxu0 0.0
    %1838 = vmatprep.subr.mxu0 0.0
    %1839 = vmatpush1.msra.mxu0 0.0
    %1840 = vmatprep.subr.mxu0 0.0
    %1841 = vmatpush1.msra.mxu0 0.0
    %1842 = vmatprep.subr.mxu0 0.0
    %1843 = vmatpush1.msra.mxu0 0.0
    %1844 = vmatprep.subr.mxu0 0.0
    %1845 = vmatpush1.msra.mxu0 0.0
    %1846 = vmatprep.subr.mxu0 0.0
    %1847 = vmatpush1.msra.mxu0 0.0
    %1848 = vmatprep.subr.mxu0 0.0
    %1849 = vmatpush1.msra.mxu0 0.0
    %1850 = vmatprep.subr.mxu0 0.0
    %1851 = vmatpush1.msra.mxu0 0.0
    %1852 = vmatprep.subr.mxu0 0.0
    %1853 = vmatpush1.msra.mxu0 0.0
    %1854 = vmatprep.subr.mxu0 0.0
    %1855 = vmatpush1.msra.mxu0 0.0
    %1856 = vmatprep.subr.mxu0 0.0
    %1857 = vmatpush1.msra.mxu0 0.0
    %1858 = vmatprep.subr.mxu0 0.0
    %1859 = vmatpush1.msra.mxu0 0.0
    %1860 = vmatprep.subr.mxu0 0.0
    %1861 = vmatpush1.msra.mxu0 0.0
    %1862 = vmatprep.subr.mxu0 0.0
    %1863 = vmatpush1.msra.mxu0 0.0
    %1864 = vmatprep.subr.mxu0 0.0
    %1865 = vmatpush1.msra.mxu0 0.0
    %1866 = vmatprep.subr.mxu0 0.0
    %1867 = vmatpush1.msra.mxu0 0.0
    %1868 = vmatprep.subr.mxu0 0.0
    %1869 = vmatpush1.msra.mxu0 0.0
    %1870 = vmatprep.mubr.f32.mxu0 0.0
    %1871 = vmatmul.mubr.f32.gmra.mrb[0].mxu0 %v1804
    %v1872 = vpop.f32.mrb[0].mxu0
    %v1873 = vadd.f32 %v1801, %v1872
    %v1874 = vpop.f32.mrb[0].mxu0
    %1875 = vdwg.mxu0
    %1876 = vst [vmem:[#allocation3] sm:$0x3] %v1873
    // Predicated region
    $region38: #{wdcnn_forward.1} parent=1 // pred_check
      _
    $region39: #{wdcnn_forward.1} parent=1 // pred_check_branch
      %1878 = sbr.rel (0) target = $region41
    $region40: #{wdcnn_forward.1} parent=1 // pred_region
      %s1880 = ssub.s32 32, 32
      %1881 = vsyncadd [#allocation4], %s1880
      %s1883 = sshll.u32 [#allocation3], 4
      %s1884 = int_to_ptr.vmem [resolvable:$true] %s1883
      %1886 = dma.vmem_to_hbm [thread:$0]  %s1884, 32, %s9, [#allocation4]
    $region41: #{wdcnn_forward.1} parent=1 // pred_fallthru
      _
    // Predicated region
    $region42: #{wdcnn_forward.1} parent=1 // pred_check
      _
    $region43: #{wdcnn_forward.1} parent=1 // pred_check_branch
      %1888 = sbr.rel (0) target = $region45
    $region44: #{wdcnn_forward.1} parent=1 // pred_region
      %1889 = dma.done [#allocation4], 32
    $region45: #{wdcnn_forward.1} parent=1 // pred_fallthru
      _
    %1890 = vsyncpa [#allocation4], 1

</llo_original>
